<compile_context>
chip_gen: v6e
topology: v6e:2x2x1
jax: 0.10.0
libtpu: 0.0.40
codegen_flags: <defaults>
</compile_context>

<pallas_src>
import functools

import jax
import jax.numpy as jnp
from jax.experimental import pallas as pl
from jax.experimental.pallas import tpu as pltpu


_SMALL_BYPASS_BYTES = 256 * 1024  # below this, one whole-array grid step


# ---------------------------------------------------------------------------
# Generation-aware configuration (VMEM budget, TensorCore count heuristic).
# ---------------------------------------------------------------------------
@functools.lru_cache(maxsize=1)
def _generation_config():
    vmem = None
    num_cores = None
    try:
        info = pltpu.get_tpu_info()
        vmem = getattr(info, "vmem_capacity_bytes", None)
        num_cores = getattr(info, "num_cores", None)
    except Exception:  # info unavailable (e.g. interpret mode) -> conservative
        pass
    if vmem is None:
        vmem = 64 * 1024 * 1024  # assume the smallest (v7x-like) VMEM

    if num_cores is not None:
        two_tc = num_cores >= 2
    else:
        # Heuristic: v5e/v6e report ~128 MiB VMEM and have 1 TC; v7x reports
        # ~64 MiB per TC and has 2 TCs per chip.
        two_tc = vmem < 100 * 1024 * 1024

    if vmem >= 100 * 1024 * 1024:
        # v5e / v6e: 128 MiB physical VMEM, single TensorCore.
        return {
            "tile_budget": 8 * 1024 * 1024,
            "vmem_limit": 64 * 1024 * 1024,
            "two_tensorcores": two_tc,
        }
    # v7x-like: 64 MiB physical VMEM per TC, 2 TCs per chip, 3.2 TB/s HBM.
    return {
        "tile_budget": 4 * 1024 * 1024,
        "vmem_limit": 48 * 1024 * 1024,
        "two_tensorcores": two_tc,
    }


def _sublane(itemsize):
    return {4: 8, 2: 16, 1: 32}.get(itemsize, 8)


# ---------------------------------------------------------------------------
# Fast path: perm == (0, 2, 3, 1)   (NCHW -> NHWC), lane-dense output slab.
# ---------------------------------------------------------------------------
def _nchw_to_nhwc_kernel(x_ref, o_ref):
    # x_ref: (1, C, TH, W) input tile; o_ref: (1, TH, W*C) lane-dense output.
    t = jnp.transpose(x_ref[...], (0, 2, 3, 1))  # (1, TH, W, C) — XLU transpose
    # Collapse the two minormost dims so the store is a wide (W*C-lane) vector
    # store instead of a C-lane masked store (biggest measured lever).
    o_ref[...] = t.reshape(o_ref.shape)


def _choose_h_tile(n, c, h, w, itemsize, budget_bytes, prefer_two_steps):
    """Pick TH for the NCHW->NHWC fast path.

    Constraints: TH divides H; TH is sublane-aligned (or equals H); the
    per-side tile (C*TH*W*itemsize) fits the per-generation budget.  On chips
    with two TensorCores and N == 1, prefer TH <= H/2 so there are at least
    two 'parallel' grid steps to shard across cores.
    """
    sub = _sublane(itemsize)
    divisors = [d for d in range(h, 0, -1) if h % d == 0]  # descending

    def aligned(th):
        return th % sub == 0 or th == h

    def fits(th):
        return c * th * w * itemsize <= budget_bytes

    cands = [d for d in divisors if aligned(d) and fits(d)]
    if prefer_two_steps and n == 1:
        small = [d for d in cands if d <= max(h // 2, 1)]
        if small:
            return small[0]
    if cands:
        return cands[0]
    # Nothing fits the budget: take the SMALLEST aligned divisor (minimizes
    # VMEM pressure; still correct even if over budget).
    aligned_divs = [d for d in divisors if aligned(d)]
    return aligned_divs[-1]


def _permute_nchw_to_nhwc(x, cfg):
    n, c, h, w = x.shape
    itemsize = x.dtype.itemsize
    th = _choose_h_tile(n, c, h, w, itemsize,
                        cfg["tile_budget"], cfg["two_tensorcores"])
    grid = (n, h // th)

    out2 = pl.pallas_call(
        _nchw_to_nhwc_kernel,
        out_shape=jax.ShapeDtypeStruct((n, h, w * c), x.dtype),
        grid=grid,
        in_specs=[pl.BlockSpec((1, c, th, w), lambda ni, hi: (ni, 0, hi, 0))],
        out_specs=pl.BlockSpec((1, th, w * c), lambda ni, hi: (ni, hi, 0)),
        compiler_params=pltpu.CompilerParams(
            dimension_semantics=("parallel", "parallel"),
            vmem_limit_bytes=cfg["vmem_limit"],
        ),
        cost_estimate=pl.CostEstimate(
            flops=0, transcendentals=0,
            bytes_accessed=2 * x.size * itemsize,
        ),
    )(x)
    # Free contiguous reshape back to NHWC (layout is already channels-last).
    return out2.reshape(n, h, w, c)


# ---------------------------------------------------------------------------
# General path: arbitrary 4-axis permutation, tiled so blocks fit VMEM.
# ---------------------------------------------------------------------------
def _general_permute_kernel(perm, x_ref, o_ref):
    o_ref[...] = jnp.transpose(x_ref[...], perm)


def _permute_general(x, perm, cfg):
    in_shape = x.shape
    out_shape = tuple(in_shape[p] for p in perm)
    itemsize = x.dtype.itemsize
    budget = cfg["tile_budget"]

    # Grid axis 0: input axis 0, block size 1.
    # Grid axis 1: chunk one of input axes {1, 2} that does NOT feed the
    # output's lane (minor) dim, keeping both input loads and output stores as
    # wide as the permutation allows.
    out_minor_in_axis = perm[3]
    cand_axes = [a for a in (1, 2) if a != out_minor_in_axis]

    def needs_alignment(a):
        # Chunk size must be sublane-aligned if this axis sits in a
        # second-to-last position on either the input or the output block.
        return a == 2 or perm.index(a) == 2

    # Prefer an unconstrained chunk axis; among equals, the larger extent.
    cand_axes.sort(key=lambda a: (needs_alignment(a), -in_shape[a]))
    chunk_axis = cand_axes[0]

    slab_bytes = itemsize * in_shape[1] * in_shape[2] * in_shape[3]
    ext = in_shape[chunk_axis]
    if slab_bytes <= budget:
        chunk = ext
    else:
        per_unit = max(slab_bytes // ext, 1)
        max_chunk = max(budget // per_unit, 1)
        sub = _sublane(itemsize) if needs_alignment(chunk_axis) else 1
        divisors = [d for d in range(ext, 0, -1) if ext % d == 0]  # descending

        def aligned(d):
            return sub == 1 or d % sub == 0 or d == ext

        good = [d for d in divisors if aligned(d) and d <= max_chunk]
        if good:
            chunk = good[0]
        else:
            aligned_divs = [d for d in divisors if aligned(d)]
            chunk = aligned_divs[-1]  # smallest aligned divisor

    n_chunks = ext // chunk
    grid = (in_shape[0], n_chunks)

    in_block = [1, in_shape[1], in_shape[2], in_shape[3]]
    in_block[chunk_axis] = chunk
    in_block = tuple(in_block)

    out_axis_of_in0 = perm.index(0)
    out_axis_of_chunk = perm.index(chunk_axis)

    out_block = list(out_shape)
    out_block[out_axis_of_in0] = 1
    out_block[out_axis_of_chunk] = chunk
    out_block = tuple(out_block)

    def in_index_map(i, j):
        idx = [0, 0, 0, 0]
        idx[0] = i
        idx[chunk_axis] = j
        return tuple(idx)

    def out_index_map(i, j):
        idx = [0, 0, 0, 0]
        idx[out_axis_of_in0] = i
        idx[out_axis_of_chunk] = j
        return tuple(idx)

    kernel = functools.partial(_general_permute_kernel, perm)
    return pl.pallas_call(
        kernel,
        out_shape=jax.ShapeDtypeStruct(out_shape, x.dtype),
        grid=grid,
        in_specs=[pl.BlockSpec(in_block, in_index_map)],
        out_specs=pl.BlockSpec(out_block, out_index_map),
        compiler_params=pltpu.CompilerParams(
            dimension_semantics=("parallel", "parallel"),
            vmem_limit_bytes=cfg["vmem_limit"],
        ),
        cost_estimate=pl.CostEstimate(
            flops=0, transcendentals=0,
            bytes_accessed=2 * x.size * itemsize,
        ),
    )(x)


# ---------------------------------------------------------------------------
# Small-tensor bypass: one grid step, whole array resident in VMEM.
# ---------------------------------------------------------------------------
def _permute_small(x, perm):
    out_shape = tuple(x.shape[p] for p in perm)
    kernel = functools.partial(_general_permute_kernel, perm)
    return pl.pallas_call(
        kernel,
        out_shape=jax.ShapeDtypeStruct(out_shape, x.dtype),
        cost_estimate=pl.CostEstimate(
            flops=0, transcendentals=0,
            bytes_accessed=2 * x.size * x.dtype.itemsize,
        ),
    )(x)


# ---------------------------------------------------------------------------
# Module-equivalent wrapper.
# ---------------------------------------------------------------------------
def permute_channels(x, perm):
    """Pallas equivalent of torch.permute(x, perm) for 4-D tensors."""
    perm = tuple(int(p) for p in perm)
    assert x.ndim == 4 and sorted(perm) == [0, 1, 2, 3]

    if perm == (0, 1, 2, 3):
        return x  # identity permutation: torch.permute returns a view

    total_bytes = x.size * x.dtype.itemsize
    if total_bytes <= _SMALL_BYPASS_BYTES:
        return _permute_small(x, perm)

    cfg = _generation_config()
    if perm == (0, 2, 3, 1):
        return _permute_nchw_to_nhwc(x, cfg)
    return _permute_general(x, perm, cfg)


if __name__ == "__main__":
    key = jax.random.PRNGKey(0)

    # Module "parameters": the permutation given at __init__.
    PERM = (0, 2, 3, 1)   # NCHW -> NHWC, the one CCVPE uses.
    PERM2 = (1, 0, 2, 3)  # a permutation where input axis 0 moves.

    # --- Small shapes (exercise the single-step bypass kernel) -------------
    N, C, H, W = 2, 4, 16, 16
    x = jax.random.normal(key, (N, C, H, W), dtype=jnp.float32)

    out = jax.block_until_ready(permute_channels(x, PERM))
    ref = jnp.transpose(x, PERM)
    assert out.shape == ref.shape and out.dtype == ref.dtype
    assert bool(jnp.all(out == ref)), "small-path NCHW->NHWC mismatch"

    out2 = jax.block_until_ready(permute_channels(x, PERM2))
    ref2 = jnp.transpose(x, PERM2)
    assert out2.shape == ref2.shape
    assert bool(jnp.all(out2 == ref2)), "small-path general permute mismatch"

    # --- Larger (still modest) shapes: tiled fast path & tiled general path -
    key2 = jax.random.PRNGKey(0)
    xb = jax.random.normal(key2, (2, 8, 64, 128), dtype=jnp.float32)  # 512 KiB

    outb = jax.block_until_ready(permute_channels(xb, PERM))
    refb = jnp.transpose(xb, PERM)
    assert outb.shape == refb.shape
    assert bool(jnp.all(outb == refb)), "tiled NCHW->NHWC mismatch"

    outb2 = jax.block_until_ready(permute_channels(xb, PERM2))
    refb2 = jnp.transpose(xb, PERM2)
    assert outb2.shape == refb2.shape
    assert bool(jnp.all(outb2 == refb2)), "tiled general permute mismatch"

    # --- N == 1 fast path (exercises the two-TensorCore H-split rule) ------
    x1 = jax.random.normal(key2, (1, 8, 128, 128), dtype=jnp.float32)  # 512 KiB
    out1 = jax.block_until_ready(permute_channels(x1, PERM))
    ref1 = jnp.transpose(x1, PERM)
    assert out1.shape == ref1.shape
    assert bool(jnp.all(out1 == ref1)), "N=1 NCHW->NHWC mismatch"

    print("KERNEL_OK")
</pallas_src>

<mosaic_0001>
module attributes {stable_mosaic.version = 11 : i64} {
  func.func @_general_permute_kernel(%arg0: memref<2x4x16x16xf32, #tpu.memory_space<vmem>>, %arg1: memref<2x16x16x4xf32, #tpu.memory_space<vmem>>) attributes {dimension_semantics = [], scalar_prefetch = 0 : i64, scratch_operands = 0 : i64, tpu.core_type = #tpu.core_type<tc>} {
    %c0 = arith.constant 0 : index
    %c0_0 = arith.constant 0 : index
    %c0_1 = arith.constant 0 : index
    %c0_2 = arith.constant 0 : index
    %0 = vector.load %arg0[%c0, %c0_0, %c0_1, %c0_2] : memref<2x4x16x16xf32, #tpu.memory_space<vmem>>, vector<2x4x16x16xf32>
    %1 = tpu.transpose %0, [0, 2, 3, 1] : vector<2x4x16x16xf32> -> vector<2x16x16x4xf32>
    %c0_3 = arith.constant 0 : index
    %c0_4 = arith.constant 0 : index
    %c0_5 = arith.constant 0 : index
    %c0_6 = arith.constant 0 : index
    %2 = vector.load %arg1[%c0_3, %c0_4, %c0_5, %c0_6] : memref<2x16x16x4xf32, #tpu.memory_space<vmem>>, vector<2x16x16x4xf32>
    tpu.vector_store %arg1[%c0_3, %c0_4, %c0_5, %c0_6], %1 {strides = array<i32>} : memref<2x16x16x4xf32, #tpu.memory_space<vmem>>, vector<2x16x16x4xf32>,
    return
  }
}

</mosaic_0001>

<llo_original>
// kernel: tpu_custom_call.1
$region0: #{tpu_custom_call.1}
  #allocation0 [shape = 'u32[]', space=smem, size = 0x4, offset = 0x4, fixed_abs, tag = 'smem constant byte address 0x4 - core index']
  #allocation1 [shape = 'u32[144,128]{1,0:T(1,128)}', space=vmem, size = 0x12000, scoped, tag = 'internal scratch']
  %s0 = inlined_call_operand.hbm [shape: f32[2,4,16,16], index: 0, kind: input, shape index: {}]
  %s1 = inlined_call_operand.vmem [shape: f32[2,16,16,4], index: 1, kind: output, shape index: {}]
  %s2 = sld [smem:[#allocation0]]
  $region18: #{tpu_custom_call.1} parent=0
    _
  %s4 = ssub.s32 1, %s2
  %s5 = scalar_select 0, %s4, %s2
  $region1: #{tpu_custom_call.1} parent=0
    #allocation2 [shape = 'u8[65536]{0}', space=vmem, size = 0x10000, scoped, tag = 'input window, operand 0, single buffered']
    #allocation3 [shape = 's32[1]{0}', space=sflag, size = 0x4, scoped, tag = 'scoped memory for tpu_custom_call.1']
    %6 = vsyncpa [#allocation3], 0
    // Predicated region
    $region2: #{tpu_custom_call.1} parent=1 // pred_check
      _
    $region3: #{tpu_custom_call.1} parent=1 // pred_check_branch
      %8 = sbr.rel (0) target = $region5
    $region4: #{tpu_custom_call.1} parent=1 // pred_region
      %s10 = ssub.s32 2048, 2048
      %11 = vsyncadd [#allocation3], %s10
      %s12 = sshll.u32 [#allocation2], 4
      %s13 = int_to_ptr.vmem [resolvable:$true] %s12
      %18 = dma.hbm_to_vmem [thread:$0]  %s0, 2048, %s13, [#allocation3], 128, 128, 8
    $region5: #{tpu_custom_call.1} parent=1 // pred_fallthru
      _
    // Predicated region
    $region6: #{tpu_custom_call.1} parent=1 // pred_check
      _
    $region7: #{tpu_custom_call.1} parent=1 // pred_check_branch
      %20 = sbr.rel (0) target = $region9
    $region8: #{tpu_custom_call.1} parent=1 // pred_region
      %21 = dma.done [#allocation3], 2048
    $region9: #{tpu_custom_call.1} parent=1 // pred_fallthru
      _
    %v22 = vld [vmem:[#allocation2] sm:$0xff]
    %v23 = vld [vmem:[#allocation2 + $0x8] sm:$0xff]
    %v24 = vld [vmem:[#allocation2 + $0x10] sm:$0xff]
    %v25 = vld [vmem:[#allocation2 + $0x18] sm:$0xff]
    %v26 = vld [vmem:[#allocation2 + $0x20] sm:$0xff]
    %v27 = vld [vmem:[#allocation2 + $0x28] sm:$0xff]
    %v28 = vld [vmem:[#allocation2 + $0x30] sm:$0xff]
    %v29 = vld [vmem:[#allocation2 + $0x38] sm:$0xff]
    %v30 = vld [vmem:[#allocation2 + $0x40] sm:$0xff]
    %v31 = vld [vmem:[#allocation2 + $0x48] sm:$0xff]
    %v32 = vld [vmem:[#allocation2 + $0x50] sm:$0xff]
    %v33 = vld [vmem:[#allocation2 + $0x58] sm:$0xff]
    %v34 = vld [vmem:[#allocation2 + $0x60] sm:$0xff]
    %v35 = vld [vmem:[#allocation2 + $0x68] sm:$0xff]
    %v36 = vld [vmem:[#allocation2 + $0x70] sm:$0xff]
    %v37 = vld [vmem:[#allocation2 + $0x78] sm:$0xff]
    %38 = vxpose.xlu0.b32.start [1/16] %v22, 128
    %39 = vxpose.xlu0.b32.cont [2/16] %v23, 128
    %40 = vxpose.xlu0.b32.cont [3/16] 0.0, 128
    %41 = vxpose.xlu0.b32.cont [4/16] 0.0, 128
    %42 = vxpose.xlu0.b32.cont [5/16] 0.0, 128
    %43 = vxpose.xlu0.b32.cont [6/16] 0.0, 128
    %44 = vxpose.xlu0.b32.cont [7/16] 0.0, 128
    %45 = vxpose.xlu0.b32.cont [8/16] 0.0, 128
    %46 = vxpose.xlu0.b32.cont [9/16] 0.0, 128
    %47 = vxpose.xlu0.b32.cont [10/16] 0.0, 128
    %48 = vxpose.xlu0.b32.cont [11/16] 0.0, 128
    %49 = vxpose.xlu0.b32.cont [12/16] 0.0, 128
    %50 = vxpose.xlu0.b32.cont [13/16] 0.0, 128
    %51 = vxpose.xlu0.b32.cont [14/16] 0.0, 128
    %52 = vxpose.xlu0.b32.cont [15/16] 0.0, 128
    %53 = vxpose.xlu0.b32.end [16/16] 0.0, 128
    %v54 = vpop.trf.xlu0
    %v55 = vpop.trf.xlu0
    %v56 = vpop.trf.xlu0
    %v57 = vpop.trf.xlu0
    %v58 = vpop.trf.xlu0
    %v59 = vpop.trf.xlu0
    %v60 = vpop.trf.xlu0
    %v61 = vpop.trf.xlu0
    %v62 = vpop.trf.xlu0
    %v63 = vpop.trf.xlu0
    %v64 = vpop.trf.xlu0
    %v65 = vpop.trf.xlu0
    %v66 = vpop.trf.xlu0
    %v67 = vpop.trf.xlu0
    %v68 = vpop.trf.xlu0
    %v69 = vpop.trf.xlu0
    %70 = vxpose.xlu0.b32.start [1/16] %v24, 128
    %71 = vxpose.xlu0.b32.cont [2/16] %v25, 128
    %72 = vxpose.xlu0.b32.cont [3/16] 0.0, 128
    %73 = vxpose.xlu0.b32.cont [4/16] 0.0, 128
    %74 = vxpose.xlu0.b32.cont [5/16] 0.0, 128
    %75 = vxpose.xlu0.b32.cont [6/16] 0.0, 128
    %76 = vxpose.xlu0.b32.cont [7/16] 0.0, 128
    %77 = vxpose.xlu0.b32.cont [8/16] 0.0, 128
    %78 = vxpose.xlu0.b32.cont [9/16] 0.0, 128
    %79 = vxpose.xlu0.b32.cont [10/16] 0.0, 128
    %80 = vxpose.xlu0.b32.cont [11/16] 0.0, 128
    %81 = vxpose.xlu0.b32.cont [12/16] 0.0, 128
    %82 = vxpose.xlu0.b32.cont [13/16] 0.0, 128
    %83 = vxpose.xlu0.b32.cont [14/16] 0.0, 128
    %84 = vxpose.xlu0.b32.cont [15/16] 0.0, 128
    %85 = vxpose.xlu0.b32.end [16/16] 0.0, 128
    %v86 = vpop.trf.xlu0
    %v87 = vpop.trf.xlu0
    %v88 = vpop.trf.xlu0
    %v89 = vpop.trf.xlu0
    %v90 = vpop.trf.xlu0
    %v91 = vpop.trf.xlu0
    %v92 = vpop.trf.xlu0
    %v93 = vpop.trf.xlu0
    %v94 = vpop.trf.xlu0
    %v95 = vpop.trf.xlu0
    %v96 = vpop.trf.xlu0
    %v97 = vpop.trf.xlu0
    %v98 = vpop.trf.xlu0
    %v99 = vpop.trf.xlu0
    %v100 = vpop.trf.xlu0
    %v101 = vpop.trf.xlu0
    %102 = vxpose.xlu0.b32.start [1/16] %v26, 128
    %103 = vxpose.xlu0.b32.cont [2/16] %v27, 128
    %104 = vxpose.xlu0.b32.cont [3/16] 0.0, 128
    %105 = vxpose.xlu0.b32.cont [4/16] 0.0, 128
    %106 = vxpose.xlu0.b32.cont [5/16] 0.0, 128
    %107 = vxpose.xlu0.b32.cont [6/16] 0.0, 128
    %108 = vxpose.xlu0.b32.cont [7/16] 0.0, 128
    %109 = vxpose.xlu0.b32.cont [8/16] 0.0, 128
    %110 = vxpose.xlu0.b32.cont [9/16] 0.0, 128
    %111 = vxpose.xlu0.b32.cont [10/16] 0.0, 128
    %112 = vxpose.xlu0.b32.cont [11/16] 0.0, 128
    %113 = vxpose.xlu0.b32.cont [12/16] 0.0, 128
    %114 = vxpose.xlu0.b32.cont [13/16] 0.0, 128
    %115 = vxpose.xlu0.b32.cont [14/16] 0.0, 128
    %116 = vxpose.xlu0.b32.cont [15/16] 0.0, 128
    %117 = vxpose.xlu0.b32.end [16/16] 0.0, 128
    %v118 = vpop.trf.xlu0
    %v119 = vpop.trf.xlu0
    %v120 = vpop.trf.xlu0
    %v121 = vpop.trf.xlu0
    %v122 = vpop.trf.xlu0
    %v123 = vpop.trf.xlu0
    %v124 = vpop.trf.xlu0
    %v125 = vpop.trf.xlu0
    %v126 = vpop.trf.xlu0
    %v127 = vpop.trf.xlu0
    %v128 = vpop.trf.xlu0
    %v129 = vpop.trf.xlu0
    %v130 = vpop.trf.xlu0
    %v131 = vpop.trf.xlu0
    %v132 = vpop.trf.xlu0
    %v133 = vpop.trf.xlu0
    %134 = vxpose.xlu0.b32.start [1/16] %v28, 128
    %135 = vxpose.xlu0.b32.cont [2/16] %v29, 128
    %136 = vxpose.xlu0.b32.cont [3/16] 0.0, 128
    %137 = vxpose.xlu0.b32.cont [4/16] 0.0, 128
    %138 = vxpose.xlu0.b32.cont [5/16] 0.0, 128
    %139 = vxpose.xlu0.b32.cont [6/16] 0.0, 128
    %140 = vxpose.xlu0.b32.cont [7/16] 0.0, 128
    %141 = vxpose.xlu0.b32.cont [8/16] 0.0, 128
    %142 = vxpose.xlu0.b32.cont [9/16] 0.0, 128
    %143 = vxpose.xlu0.b32.cont [10/16] 0.0, 128
    %144 = vxpose.xlu0.b32.cont [11/16] 0.0, 128
    %145 = vxpose.xlu0.b32.cont [12/16] 0.0, 128
    %146 = vxpose.xlu0.b32.cont [13/16] 0.0, 128
    %147 = vxpose.xlu0.b32.cont [14/16] 0.0, 128
    %148 = vxpose.xlu0.b32.cont [15/16] 0.0, 128
    %149 = vxpose.xlu0.b32.end [16/16] 0.0, 128
    %v150 = vpop.trf.xlu0
    %v151 = vpop.trf.xlu0
    %v152 = vpop.trf.xlu0
    %v153 = vpop.trf.xlu0
    %v154 = vpop.trf.xlu0
    %v155 = vpop.trf.xlu0
    %v156 = vpop.trf.xlu0
    %v157 = vpop.trf.xlu0
    %v158 = vpop.trf.xlu0
    %v159 = vpop.trf.xlu0
    %v160 = vpop.trf.xlu0
    %v161 = vpop.trf.xlu0
    %v162 = vpop.trf.xlu0
    %v163 = vpop.trf.xlu0
    %v164 = vpop.trf.xlu0
    %v165 = vpop.trf.xlu0
    %166 = vxpose.xlu0.b32.start [1/16] %v30, 128
    %167 = vxpose.xlu0.b32.cont [2/16] %v31, 128
    %168 = vxpose.xlu0.b32.cont [3/16] 0.0, 128
    %169 = vxpose.xlu0.b32.cont [4/16] 0.0, 128
    %170 = vxpose.xlu0.b32.cont [5/16] 0.0, 128
    %171 = vxpose.xlu0.b32.cont [6/16] 0.0, 128
    %172 = vxpose.xlu0.b32.cont [7/16] 0.0, 128
    %173 = vxpose.xlu0.b32.cont [8/16] 0.0, 128
    %174 = vxpose.xlu0.b32.cont [9/16] 0.0, 128
    %175 = vxpose.xlu0.b32.cont [10/16] 0.0, 128
    %176 = vxpose.xlu0.b32.cont [11/16] 0.0, 128
    %177 = vxpose.xlu0.b32.cont [12/16] 0.0, 128
    %178 = vxpose.xlu0.b32.cont [13/16] 0.0, 128
    %179 = vxpose.xlu0.b32.cont [14/16] 0.0, 128
    %180 = vxpose.xlu0.b32.cont [15/16] 0.0, 128
    %181 = vxpose.xlu0.b32.end [16/16] 0.0, 128
    %v182 = vpop.trf.xlu0
    %v183 = vpop.trf.xlu0
    %v184 = vpop.trf.xlu0
    %v185 = vpop.trf.xlu0
    %v186 = vpop.trf.xlu0
    %v187 = vpop.trf.xlu0
    %v188 = vpop.trf.xlu0
    %v189 = vpop.trf.xlu0
    %v190 = vpop.trf.xlu0
    %v191 = vpop.trf.xlu0
    %v192 = vpop.trf.xlu0
    %v193 = vpop.trf.xlu0
    %v194 = vpop.trf.xlu0
    %v195 = vpop.trf.xlu0
    %v196 = vpop.trf.xlu0
    %v197 = vpop.trf.xlu0
    %198 = vxpose.xlu0.b32.start [1/16] %v32, 128
    %199 = vxpose.xlu0.b32.cont [2/16] %v33, 128
    %200 = vxpose.xlu0.b32.cont [3/16] 0.0, 128
    %201 = vxpose.xlu0.b32.cont [4/16] 0.0, 128
    %202 = vxpose.xlu0.b32.cont [5/16] 0.0, 128
    %203 = vxpose.xlu0.b32.cont [6/16] 0.0, 128
    %204 = vxpose.xlu0.b32.cont [7/16] 0.0, 128
    %205 = vxpose.xlu0.b32.cont [8/16] 0.0, 128
    %206 = vxpose.xlu0.b32.cont [9/16] 0.0, 128
    %207 = vxpose.xlu0.b32.cont [10/16] 0.0, 128
    %208 = vxpose.xlu0.b32.cont [11/16] 0.0, 128
    %209 = vxpose.xlu0.b32.cont [12/16] 0.0, 128
    %210 = vxpose.xlu0.b32.cont [13/16] 0.0, 128
    %211 = vxpose.xlu0.b32.cont [14/16] 0.0, 128
    %212 = vxpose.xlu0.b32.cont [15/16] 0.0, 128
    %213 = vxpose.xlu0.b32.end [16/16] 0.0, 128
    %v214 = vpop.trf.xlu0
    %v215 = vpop.trf.xlu0
    %v216 = vpop.trf.xlu0
    %v217 = vpop.trf.xlu0
    %v218 = vpop.trf.xlu0
    %v219 = vpop.trf.xlu0
    %v220 = vpop.trf.xlu0
    %v221 = vpop.trf.xlu0
    %v222 = vpop.trf.xlu0
    %v223 = vpop.trf.xlu0
    %v224 = vpop.trf.xlu0
    %v225 = vpop.trf.xlu0
    %v226 = vpop.trf.xlu0
    %v227 = vpop.trf.xlu0
    %v228 = vpop.trf.xlu0
    %v229 = vpop.trf.xlu0
    %230 = vxpose.xlu0.b32.start [1/16] %v34, 128
    %231 = vxpose.xlu0.b32.cont [2/16] %v35, 128
    %232 = vxpose.xlu0.b32.cont [3/16] 0.0, 128
    %233 = vxpose.xlu0.b32.cont [4/16] 0.0, 128
    %234 = vxpose.xlu0.b32.cont [5/16] 0.0, 128
    %235 = vxpose.xlu0.b32.cont [6/16] 0.0, 128
    %236 = vxpose.xlu0.b32.cont [7/16] 0.0, 128
    %237 = vxpose.xlu0.b32.cont [8/16] 0.0, 128
    %238 = vxpose.xlu0.b32.cont [9/16] 0.0, 128
    %239 = vxpose.xlu0.b32.cont [10/16] 0.0, 128
    %240 = vxpose.xlu0.b32.cont [11/16] 0.0, 128
    %241 = vxpose.xlu0.b32.cont [12/16] 0.0, 128
    %242 = vxpose.xlu0.b32.cont [13/16] 0.0, 128
    %243 = vxpose.xlu0.b32.cont [14/16] 0.0, 128
    %244 = vxpose.xlu0.b32.cont [15/16] 0.0, 128
    %245 = vxpose.xlu0.b32.end [16/16] 0.0, 128
    %v246 = vpop.trf.xlu0
    %v247 = vpop.trf.xlu0
    %v248 = vpop.trf.xlu0
    %v249 = vpop.trf.xlu0
    %v250 = vpop.trf.xlu0
    %v251 = vpop.trf.xlu0
    %v252 = vpop.trf.xlu0
    %v253 = vpop.trf.xlu0
    %v254 = vpop.trf.xlu0
    %v255 = vpop.trf.xlu0
    %v256 = vpop.trf.xlu0
    %v257 = vpop.trf.xlu0
    %v258 = vpop.trf.xlu0
    %v259 = vpop.trf.xlu0
    %v260 = vpop.trf.xlu0
    %v261 = vpop.trf.xlu0
    %262 = vxpose.xlu0.b32.start [1/16] %v36, 128
    %263 = vxpose.xlu0.b32.cont [2/16] %v37, 128
    %264 = vxpose.xlu0.b32.cont [3/16] 0.0, 128
    %265 = vxpose.xlu0.b32.cont [4/16] 0.0, 128
    %266 = vxpose.xlu0.b32.cont [5/16] 0.0, 128
    %267 = vxpose.xlu0.b32.cont [6/16] 0.0, 128
    %268 = vxpose.xlu0.b32.cont [7/16] 0.0, 128
    %269 = vxpose.xlu0.b32.cont [8/16] 0.0, 128
    %270 = vxpose.xlu0.b32.cont [9/16] 0.0, 128
    %271 = vxpose.xlu0.b32.cont [10/16] 0.0, 128
    %272 = vxpose.xlu0.b32.cont [11/16] 0.0, 128
    %273 = vxpose.xlu0.b32.cont [12/16] 0.0, 128
    %274 = vxpose.xlu0.b32.cont [13/16] 0.0, 128
    %275 = vxpose.xlu0.b32.cont [14/16] 0.0, 128
    %276 = vxpose.xlu0.b32.cont [15/16] 0.0, 128
    %277 = vxpose.xlu0.b32.end [16/16] 0.0, 128
    %v278 = vpop.trf.xlu0
    %v279 = vpop.trf.xlu0
    %v280 = vpop.trf.xlu0
    %v281 = vpop.trf.xlu0
    %v282 = vpop.trf.xlu0
    %v283 = vpop.trf.xlu0
    %v284 = vpop.trf.xlu0
    %v285 = vpop.trf.xlu0
    %v286 = vpop.trf.xlu0
    %v287 = vpop.trf.xlu0
    %v288 = vpop.trf.xlu0
    %v289 = vpop.trf.xlu0
    %v290 = vpop.trf.xlu0
    %v291 = vpop.trf.xlu0
    %v292 = vpop.trf.xlu0
    %v293 = vpop.trf.xlu0
    %v294 = vcombine.low %v54, %v118
    %v295 = vcombine.high %v54, %v118
    %v297 = vunpack.c.l.s4 1983009808
    %v298 = vunpack.c.0.s8 %v297
    %v299 = vlaneseq
    %v300 = vshrl.u32 %v299, 7
    %v301 = vsub.s32 %v298, %v300
    %v302 = vrot.slane %v294, %v301
    %v304 = vunpack.c.l.s4 1983009808
    %v305 = vunpack.c.0.s8 %v304
    %v306 = vlaneseq
    %v307 = vshrl.u32 %v306, 7
    %v308 = vsub.s32 %v305, %v307
    %v309 = vrot.slane %v295, %v308
    %v310 = vcombine.low %v86, %v150
    %v311 = vcombine.high %v86, %v150
    %v313 = vunpack.c.l.s4 1983009808
    %v314 = vunpack.c.0.s8 %v313
    %v315 = vlaneseq
    %v316 = vshrl.u32 %v315, 7
    %v317 = vsub.s32 %v314, %v316
    %v318 = vrot.slane %v310, %v317
    %v320 = vunpack.c.l.s4 1983009808
    %v321 = vunpack.c.0.s8 %v320
    %v322 = vlaneseq
    %v323 = vshrl.u32 %v322, 7
    %v324 = vsub.s32 %v321, %v323
    %v325 = vrot.slane %v311, %v324
    %v326 = vcombine.low %v302, %v318
    %v327 = vcombine.high %v302, %v318
    %v329 = vunpack.c.l.s4 1934713408
    %v330 = vunpack.c.0.s8 %v329
    %v331 = vlaneseq
    %v332 = vshrl.u32 %v331, 7
    %v333 = vsub.s32 %v330, %v332
    %v334 = vrot.slane %v326, %v333
    %v336 = vunpack.c.l.s4 1934713408
    %v337 = vunpack.c.0.s8 %v336
    %v338 = vlaneseq
    %v339 = vshrl.u32 %v338, 7
    %v340 = vsub.s32 %v337, %v339
    %v341 = vrot.slane %v327, %v340
    %v342 = vcombine.low %v309, %v325
    %v343 = vcombine.high %v309, %v325
    %v345 = vunpack.c.l.s4 1934713408
    %v346 = vunpack.c.0.s8 %v345
    %v347 = vlaneseq
    %v348 = vshrl.u32 %v347, 7
    %v349 = vsub.s32 %v346, %v348
    %v350 = vrot.slane %v342, %v349
    %v352 = vunpack.c.l.s4 1934713408
    %v353 = vunpack.c.0.s8 %v352
    %v354 = vlaneseq
    %v355 = vshrl.u32 %v354, 7
    %v356 = vsub.s32 %v353, %v355
    %v357 = vrot.slane %v343, %v356
    %v358 = vcombine.high %v334, 0.0
    %v359 = vcombine.high %v341, 0.0
    %v360 = vcombine.high %v350, 0.0
    %v361 = vcombine.high %v357, 0.0
    %v362 = vcombine.low %v55, %v119
    %v363 = vcombine.high %v55, %v119
    %v365 = vunpack.c.l.s4 1983009808
    %v366 = vunpack.c.0.s8 %v365
    %v367 = vlaneseq
    %v368 = vshrl.u32 %v367, 7
    %v369 = vsub.s32 %v366, %v368
    %v370 = vrot.slane %v362, %v369
    %v372 = vunpack.c.l.s4 1983009808
    %v373 = vunpack.c.0.s8 %v372
    %v374 = vlaneseq
    %v375 = vshrl.u32 %v374, 7
    %v376 = vsub.s32 %v373, %v375
    %v377 = vrot.slane %v363, %v376
    %v378 = vcombine.low %v87, %v151
    %v379 = vcombine.high %v87, %v151
    %v381 = vunpack.c.l.s4 1983009808
    %v382 = vunpack.c.0.s8 %v381
    %v383 = vlaneseq
    %v384 = vshrl.u32 %v383, 7
    %v385 = vsub.s32 %v382, %v384
    %v386 = vrot.slane %v378, %v385
    %v388 = vunpack.c.l.s4 1983009808
    %v389 = vunpack.c.0.s8 %v388
    %v390 = vlaneseq
    %v391 = vshrl.u32 %v390, 7
    %v392 = vsub.s32 %v389, %v391
    %v393 = vrot.slane %v379, %v392
    %v394 = vcombine.low %v370, %v386
    %v395 = vcombine.high %v370, %v386
    %v397 = vunpack.c.l.s4 1934713408
    %v398 = vunpack.c.0.s8 %v397
    %v399 = vlaneseq
    %v400 = vshrl.u32 %v399, 7
    %v401 = vsub.s32 %v398, %v400
    %v402 = vrot.slane %v394, %v401
    %v404 = vunpack.c.l.s4 1934713408
    %v405 = vunpack.c.0.s8 %v404
    %v406 = vlaneseq
    %v407 = vshrl.u32 %v406, 7
    %v408 = vsub.s32 %v405, %v407
    %v409 = vrot.slane %v395, %v408
    %v410 = vcombine.low %v377, %v393
    %v411 = vcombine.high %v377, %v393
    %v413 = vunpack.c.l.s4 1934713408
    %v414 = vunpack.c.0.s8 %v413
    %v415 = vlaneseq
    %v416 = vshrl.u32 %v415, 7
    %v417 = vsub.s32 %v414, %v416
    %v418 = vrot.slane %v410, %v417
    %v420 = vunpack.c.l.s4 1934713408
    %v421 = vunpack.c.0.s8 %v420
    %v422 = vlaneseq
    %v423 = vshrl.u32 %v422, 7
    %v424 = vsub.s32 %v421, %v423
    %v425 = vrot.slane %v411, %v424
    %v426 = vcombine.high %v402, 0.0
    %v427 = vcombine.high %v409, 0.0
    %v428 = vcombine.high %v418, 0.0
    %v429 = vcombine.high %v425, 0.0
    %v430 = vcombine.low %v182, %v246
    %v431 = vcombine.high %v182, %v246
    %v433 = vunpack.c.l.s4 1983009808
    %v434 = vunpack.c.0.s8 %v433
    %v435 = vlaneseq
    %v436 = vshrl.u32 %v435, 7
    %v437 = vsub.s32 %v434, %v436
    %v438 = vrot.slane %v430, %v437
    %v440 = vunpack.c.l.s4 1983009808
    %v441 = vunpack.c.0.s8 %v440
    %v442 = vlaneseq
    %v443 = vshrl.u32 %v442, 7
    %v444 = vsub.s32 %v441, %v443
    %v445 = vrot.slane %v431, %v444
    %v446 = vcombine.low %v214, %v278
    %v447 = vcombine.high %v214, %v278
    %v449 = vunpack.c.l.s4 1983009808
    %v450 = vunpack.c.0.s8 %v449
    %v451 = vlaneseq
    %v452 = vshrl.u32 %v451, 7
    %v453 = vsub.s32 %v450, %v452
    %v454 = vrot.slane %v446, %v453
    %v456 = vunpack.c.l.s4 1983009808
    %v457 = vunpack.c.0.s8 %v456
    %v458 = vlaneseq
    %v459 = vshrl.u32 %v458, 7
    %v460 = vsub.s32 %v457, %v459
    %v461 = vrot.slane %v447, %v460
    %v462 = vcombine.low %v438, %v454
    %v463 = vcombine.high %v438, %v454
    %v465 = vunpack.c.l.s4 1934713408
    %v466 = vunpack.c.0.s8 %v465
    %v467 = vlaneseq
    %v468 = vshrl.u32 %v467, 7
    %v469 = vsub.s32 %v466, %v468
    %v470 = vrot.slane %v462, %v469
    %v472 = vunpack.c.l.s4 1934713408
    %v473 = vunpack.c.0.s8 %v472
    %v474 = vlaneseq
    %v475 = vshrl.u32 %v474, 7
    %v476 = vsub.s32 %v473, %v475
    %v477 = vrot.slane %v463, %v476
    %v478 = vcombine.low %v445, %v461
    %v479 = vcombine.high %v445, %v461
    %v481 = vunpack.c.l.s4 1934713408
    %v482 = vunpack.c.0.s8 %v481
    %v483 = vlaneseq
    %v484 = vshrl.u32 %v483, 7
    %v485 = vsub.s32 %v482, %v484
    %v486 = vrot.slane %v478, %v485
    %v488 = vunpack.c.l.s4 1934713408
    %v489 = vunpack.c.0.s8 %v488
    %v490 = vlaneseq
    %v491 = vshrl.u32 %v490, 7
    %v492 = vsub.s32 %v489, %v491
    %v493 = vrot.slane %v479, %v492
    %v494 = vcombine.high %v470, 0.0
    %v495 = vcombine.high %v477, 0.0
    %v496 = vcombine.high %v486, 0.0
    %v497 = vcombine.high %v493, 0.0
    %v498 = vcombine.low %v183, %v247
    %v499 = vcombine.high %v183, %v247
    %v501 = vunpack.c.l.s4 1983009808
    %v502 = vunpack.c.0.s8 %v501
    %v503 = vlaneseq
    %v504 = vshrl.u32 %v503, 7
    %v505 = vsub.s32 %v502, %v504
    %v506 = vrot.slane %v498, %v505
    %v508 = vunpack.c.l.s4 1983009808
    %v509 = vunpack.c.0.s8 %v508
    %v510 = vlaneseq
    %v511 = vshrl.u32 %v510, 7
    %v512 = vsub.s32 %v509, %v511
    %v513 = vrot.slane %v499, %v512
    %v514 = vcombine.low %v215, %v279
    %v515 = vcombine.high %v215, %v279
    %v517 = vunpack.c.l.s4 1983009808
    %v518 = vunpack.c.0.s8 %v517
    %v519 = vlaneseq
    %v520 = vshrl.u32 %v519, 7
    %v521 = vsub.s32 %v518, %v520
    %v522 = vrot.slane %v514, %v521
    %v524 = vunpack.c.l.s4 1983009808
    %v525 = vunpack.c.0.s8 %v524
    %v526 = vlaneseq
    %v527 = vshrl.u32 %v526, 7
    %v528 = vsub.s32 %v525, %v527
    %v529 = vrot.slane %v515, %v528
    %v530 = vcombine.low %v506, %v522
    %v531 = vcombine.high %v506, %v522
    %v533 = vunpack.c.l.s4 1934713408
    %v534 = vunpack.c.0.s8 %v533
    %v535 = vlaneseq
    %v536 = vshrl.u32 %v535, 7
    %v537 = vsub.s32 %v534, %v536
    %v538 = vrot.slane %v530, %v537
    %v540 = vunpack.c.l.s4 1934713408
    %v541 = vunpack.c.0.s8 %v540
    %v542 = vlaneseq
    %v543 = vshrl.u32 %v542, 7
    %v544 = vsub.s32 %v541, %v543
    %v545 = vrot.slane %v531, %v544
    %v546 = vcombine.low %v513, %v529
    %v547 = vcombine.high %v513, %v529
    %v549 = vunpack.c.l.s4 1934713408
    %v550 = vunpack.c.0.s8 %v549
    %v551 = vlaneseq
    %v552 = vshrl.u32 %v551, 7
    %v553 = vsub.s32 %v550, %v552
    %v554 = vrot.slane %v546, %v553
    %v556 = vunpack.c.l.s4 1934713408
    %v557 = vunpack.c.0.s8 %v556
    %v558 = vlaneseq
    %v559 = vshrl.u32 %v558, 7
    %v560 = vsub.s32 %v557, %v559
    %v561 = vrot.slane %v547, %v560
    %v562 = vcombine.high %v538, 0.0
    %v563 = vcombine.high %v545, 0.0
    %v564 = vcombine.high %v554, 0.0
    %v565 = vcombine.high %v561, 0.0
    %566 = vxpose.xlu0.b32.start [1/16] %v334, 128
    %567 = vxpose.xlu0.b32.cont [2/16] 0.0, 128
    %568 = vxpose.xlu0.b32.cont [3/16] 0.0, 128
    %569 = vxpose.xlu0.b32.cont [4/16] 0.0, 128
    %570 = vxpose.xlu0.b32.cont [5/16] 0.0, 128
    %571 = vxpose.xlu0.b32.cont [6/16] 0.0, 128
    %572 = vxpose.xlu0.b32.cont [7/16] 0.0, 128
    %573 = vxpose.xlu0.b32.cont [8/16] 0.0, 128
    %574 = vxpose.xlu0.b32.cont [9/16] 0.0, 128
    %575 = vxpose.xlu0.b32.cont [10/16] 0.0, 128
    %576 = vxpose.xlu0.b32.cont [11/16] 0.0, 128
    %577 = vxpose.xlu0.b32.cont [12/16] 0.0, 128
    %578 = vxpose.xlu0.b32.cont [13/16] 0.0, 128
    %579 = vxpose.xlu0.b32.cont [14/16] 0.0, 128
    %580 = vxpose.xlu0.b32.cont [15/16] 0.0, 128
    %581 = vxpose.xlu0.b32.end [16/16] 0.0, 128
    %v582 = vpop.trf.xlu0
    %v583 = vpop.trf.xlu0
    %v584 = vpop.trf.xlu0
    %v585 = vpop.trf.xlu0
    %v586 = vpop.trf.xlu0
    %v587 = vpop.trf.xlu0
    %v588 = vpop.trf.xlu0
    %v589 = vpop.trf.xlu0
    %v590 = vpop.trf.xlu0
    %v591 = vpop.trf.xlu0
    %v592 = vpop.trf.xlu0
    %v593 = vpop.trf.xlu0
    %v594 = vpop.trf.xlu0
    %v595 = vpop.trf.xlu0
    %v596 = vpop.trf.xlu0
    %v597 = vpop.trf.xlu0
    %598 = vxpose.xlu0.b32.start [1/16] %v358, 128
    %599 = vxpose.xlu0.b32.cont [2/16] 0.0, 128
    %600 = vxpose.xlu0.b32.cont [3/16] 0.0, 128
    %601 = vxpose.xlu0.b32.cont [4/16] 0.0, 128
    %602 = vxpose.xlu0.b32.cont [5/16] 0.0, 128
    %603 = vxpose.xlu0.b32.cont [6/16] 0.0, 128
    %604 = vxpose.xlu0.b32.cont [7/16] 0.0, 128
    %605 = vxpose.xlu0.b32.cont [8/16] 0.0, 128
    %606 = vxpose.xlu0.b32.cont [9/16] 0.0, 128
    %607 = vxpose.xlu0.b32.cont [10/16] 0.0, 128
    %608 = vxpose.xlu0.b32.cont [11/16] 0.0, 128
    %609 = vxpose.xlu0.b32.cont [12/16] 0.0, 128
    %610 = vxpose.xlu0.b32.cont [13/16] 0.0, 128
    %611 = vxpose.xlu0.b32.cont [14/16] 0.0, 128
    %612 = vxpose.xlu0.b32.cont [15/16] 0.0, 128
    %613 = vxpose.xlu0.b32.end [16/16] 0.0, 128
    %v614 = vpop.trf.xlu0
    %v615 = vpop.trf.xlu0
    %v616 = vpop.trf.xlu0
    %v617 = vpop.trf.xlu0
    %v618 = vpop.trf.xlu0
    %v619 = vpop.trf.xlu0
    %v620 = vpop.trf.xlu0
    %v621 = vpop.trf.xlu0
    %v622 = vpop.trf.xlu0
    %v623 = vpop.trf.xlu0
    %v624 = vpop.trf.xlu0
    %v625 = vpop.trf.xlu0
    %v626 = vpop.trf.xlu0
    %v627 = vpop.trf.xlu0
    %v628 = vpop.trf.xlu0
    %v629 = vpop.trf.xlu0
    %630 = vxpose.xlu0.b32.start [1/16] %v341, 128
    %631 = vxpose.xlu0.b32.cont [2/16] 0.0, 128
    %632 = vxpose.xlu0.b32.cont [3/16] 0.0, 128
    %633 = vxpose.xlu0.b32.cont [4/16] 0.0, 128
    %634 = vxpose.xlu0.b32.cont [5/16] 0.0, 128
    %635 = vxpose.xlu0.b32.cont [6/16] 0.0, 128
    %636 = vxpose.xlu0.b32.cont [7/16] 0.0, 128
    %637 = vxpose.xlu0.b32.cont [8/16] 0.0, 128
    %638 = vxpose.xlu0.b32.cont [9/16] 0.0, 128
    %639 = vxpose.xlu0.b32.cont [10/16] 0.0, 128
    %640 = vxpose.xlu0.b32.cont [11/16] 0.0, 128
    %641 = vxpose.xlu0.b32.cont [12/16] 0.0, 128
    %642 = vxpose.xlu0.b32.cont [13/16] 0.0, 128
    %643 = vxpose.xlu0.b32.cont [14/16] 0.0, 128
    %644 = vxpose.xlu0.b32.cont [15/16] 0.0, 128
    %645 = vxpose.xlu0.b32.end [16/16] 0.0, 128
    %v646 = vpop.trf.xlu0
    %v647 = vpop.trf.xlu0
    %v648 = vpop.trf.xlu0
    %v649 = vpop.trf.xlu0
    %v650 = vpop.trf.xlu0
    %v651 = vpop.trf.xlu0
    %v652 = vpop.trf.xlu0
    %v653 = vpop.trf.xlu0
    %v654 = vpop.trf.xlu0
    %v655 = vpop.trf.xlu0
    %v656 = vpop.trf.xlu0
    %v657 = vpop.trf.xlu0
    %v658 = vpop.trf.xlu0
    %v659 = vpop.trf.xlu0
    %v660 = vpop.trf.xlu0
    %v661 = vpop.trf.xlu0
    %662 = vxpose.xlu0.b32.start [1/16] %v359, 128
    %663 = vxpose.xlu0.b32.cont [2/16] 0.0, 128
    %664 = vxpose.xlu0.b32.cont [3/16] 0.0, 128
    %665 = vxpose.xlu0.b32.cont [4/16] 0.0, 128
    %666 = vxpose.xlu0.b32.cont [5/16] 0.0, 128
    %667 = vxpose.xlu0.b32.cont [6/16] 0.0, 128
    %668 = vxpose.xlu0.b32.cont [7/16] 0.0, 128
    %669 = vxpose.xlu0.b32.cont [8/16] 0.0, 128
    %670 = vxpose.xlu0.b32.cont [9/16] 0.0, 128
    %671 = vxpose.xlu0.b32.cont [10/16] 0.0, 128
    %672 = vxpose.xlu0.b32.cont [11/16] 0.0, 128
    %673 = vxpose.xlu0.b32.cont [12/16] 0.0, 128
    %674 = vxpose.xlu0.b32.cont [13/16] 0.0, 128
    %675 = vxpose.xlu0.b32.cont [14/16] 0.0, 128
    %676 = vxpose.xlu0.b32.cont [15/16] 0.0, 128
    %677 = vxpose.xlu0.b32.end [16/16] 0.0, 128
    %v678 = vpop.trf.xlu0
    %v679 = vpop.trf.xlu0
    %v680 = vpop.trf.xlu0
    %v681 = vpop.trf.xlu0
    %v682 = vpop.trf.xlu0
    %v683 = vpop.trf.xlu0
    %v684 = vpop.trf.xlu0
    %v685 = vpop.trf.xlu0
    %v686 = vpop.trf.xlu0
    %v687 = vpop.trf.xlu0
    %v688 = vpop.trf.xlu0
    %v689 = vpop.trf.xlu0
    %v690 = vpop.trf.xlu0
    %v691 = vpop.trf.xlu0
    %v692 = vpop.trf.xlu0
    %v693 = vpop.trf.xlu0
    %694 = vxpose.xlu0.b32.start [1/16] %v350, 128
    %695 = vxpose.xlu0.b32.cont [2/16] 0.0, 128
    %696 = vxpose.xlu0.b32.cont [3/16] 0.0, 128
    %697 = vxpose.xlu0.b32.cont [4/16] 0.0, 128
    %698 = vxpose.xlu0.b32.cont [5/16] 0.0, 128
    %699 = vxpose.xlu0.b32.cont [6/16] 0.0, 128
    %700 = vxpose.xlu0.b32.cont [7/16] 0.0, 128
    %701 = vxpose.xlu0.b32.cont [8/16] 0.0, 128
    %702 = vxpose.xlu0.b32.cont [9/16] 0.0, 128
    %703 = vxpose.xlu0.b32.cont [10/16] 0.0, 128
    %704 = vxpose.xlu0.b32.cont [11/16] 0.0, 128
    %705 = vxpose.xlu0.b32.cont [12/16] 0.0, 128
    %706 = vxpose.xlu0.b32.cont [13/16] 0.0, 128
    %707 = vxpose.xlu0.b32.cont [14/16] 0.0, 128
    %708 = vxpose.xlu0.b32.cont [15/16] 0.0, 128
    %709 = vxpose.xlu0.b32.end [16/16] 0.0, 128
    %v710 = vpop.trf.xlu0
    %v711 = vpop.trf.xlu0
    %v712 = vpop.trf.xlu0
    %v713 = vpop.trf.xlu0
    %v714 = vpop.trf.xlu0
    %v715 = vpop.trf.xlu0
    %v716 = vpop.trf.xlu0
    %v717 = vpop.trf.xlu0
    %v718 = vpop.trf.xlu0
    %v719 = vpop.trf.xlu0
    %v720 = vpop.trf.xlu0
    %v721 = vpop.trf.xlu0
    %v722 = vpop.trf.xlu0
    %v723 = vpop.trf.xlu0
    %v724 = vpop.trf.xlu0
    %v725 = vpop.trf.xlu0
    %726 = vxpose.xlu0.b32.start [1/16] %v360, 128
    %727 = vxpose.xlu0.b32.cont [2/16] 0.0, 128
    %728 = vxpose.xlu0.b32.cont [3/16] 0.0, 128
    %729 = vxpose.xlu0.b32.cont [4/16] 0.0, 128
    %730 = vxpose.xlu0.b32.cont [5/16] 0.0, 128
    %731 = vxpose.xlu0.b32.cont [6/16] 0.0, 128
    %732 = vxpose.xlu0.b32.cont [7/16] 0.0, 128
    %733 = vxpose.xlu0.b32.cont [8/16] 0.0, 128
    %734 = vxpose.xlu0.b32.cont [9/16] 0.0, 128
    %735 = vxpose.xlu0.b32.cont [10/16] 0.0, 128
    %736 = vxpose.xlu0.b32.cont [11/16] 0.0, 128
    %737 = vxpose.xlu0.b32.cont [12/16] 0.0, 128
    %738 = vxpose.xlu0.b32.cont [13/16] 0.0, 128
    %739 = vxpose.xlu0.b32.cont [14/16] 0.0, 128
    %740 = vxpose.xlu0.b32.cont [15/16] 0.0, 128
    %741 = vxpose.xlu0.b32.end [16/16] 0.0, 128
    %v742 = vpop.trf.xlu0
    %v743 = vpop.trf.xlu0
    %v744 = vpop.trf.xlu0
    %v745 = vpop.trf.xlu0
    %v746 = vpop.trf.xlu0
    %v747 = vpop.trf.xlu0
    %v748 = vpop.trf.xlu0
    %v749 = vpop.trf.xlu0
    %v750 = vpop.trf.xlu0
    %v751 = vpop.trf.xlu0
    %v752 = vpop.trf.xlu0
    %v753 = vpop.trf.xlu0
    %v754 = vpop.trf.xlu0
    %v755 = vpop.trf.xlu0
    %v756 = vpop.trf.xlu0
    %v757 = vpop.trf.xlu0
    %758 = vxpose.xlu0.b32.start [1/16] %v357, 128
    %759 = vxpose.xlu0.b32.cont [2/16] 0.0, 128
    %760 = vxpose.xlu0.b32.cont [3/16] 0.0, 128
    %761 = vxpose.xlu0.b32.cont [4/16] 0.0, 128
    %762 = vxpose.xlu0.b32.cont [5/16] 0.0, 128
    %763 = vxpose.xlu0.b32.cont [6/16] 0.0, 128
    %764 = vxpose.xlu0.b32.cont [7/16] 0.0, 128
    %765 = vxpose.xlu0.b32.cont [8/16] 0.0, 128
    %766 = vxpose.xlu0.b32.cont [9/16] 0.0, 128
    %767 = vxpose.xlu0.b32.cont [10/16] 0.0, 128
    %768 = vxpose.xlu0.b32.cont [11/16] 0.0, 128
    %769 = vxpose.xlu0.b32.cont [12/16] 0.0, 128
    %770 = vxpose.xlu0.b32.cont [13/16] 0.0, 128
    %771 = vxpose.xlu0.b32.cont [14/16] 0.0, 128
    %772 = vxpose.xlu0.b32.cont [15/16] 0.0, 128
    %773 = vxpose.xlu0.b32.end [16/16] 0.0, 128
    %v774 = vpop.trf.xlu0
    %v775 = vpop.trf.xlu0
    %v776 = vpop.trf.xlu0
    %v777 = vpop.trf.xlu0
    %v778 = vpop.trf.xlu0
    %v779 = vpop.trf.xlu0
    %v780 = vpop.trf.xlu0
    %v781 = vpop.trf.xlu0
    %v782 = vpop.trf.xlu0
    %v783 = vpop.trf.xlu0
    %v784 = vpop.trf.xlu0
    %v785 = vpop.trf.xlu0
    %v786 = vpop.trf.xlu0
    %v787 = vpop.trf.xlu0
    %v788 = vpop.trf.xlu0
    %v789 = vpop.trf.xlu0
    %790 = vxpose.xlu0.b32.start [1/16] %v361, 128
    %791 = vxpose.xlu0.b32.cont [2/16] 0.0, 128
    %792 = vxpose.xlu0.b32.cont [3/16] 0.0, 128
    %793 = vxpose.xlu0.b32.cont [4/16] 0.0, 128
    %794 = vxpose.xlu0.b32.cont [5/16] 0.0, 128
    %795 = vxpose.xlu0.b32.cont [6/16] 0.0, 128
    %796 = vxpose.xlu0.b32.cont [7/16] 0.0, 128
    %797 = vxpose.xlu0.b32.cont [8/16] 0.0, 128
    %798 = vxpose.xlu0.b32.cont [9/16] 0.0, 128
    %799 = vxpose.xlu0.b32.cont [10/16] 0.0, 128
    %800 = vxpose.xlu0.b32.cont [11/16] 0.0, 128
    %801 = vxpose.xlu0.b32.cont [12/16] 0.0, 128
    %802 = vxpose.xlu0.b32.cont [13/16] 0.0, 128
    %803 = vxpose.xlu0.b32.cont [14/16] 0.0, 128
    %804 = vxpose.xlu0.b32.cont [15/16] 0.0, 128
    %805 = vxpose.xlu0.b32.end [16/16] 0.0, 128
    %v806 = vpop.trf.xlu0
    %v807 = vpop.trf.xlu0
    %v808 = vpop.trf.xlu0
    %v809 = vpop.trf.xlu0
    %v810 = vpop.trf.xlu0
    %v811 = vpop.trf.xlu0
    %v812 = vpop.trf.xlu0
    %v813 = vpop.trf.xlu0
    %v814 = vpop.trf.xlu0
    %v815 = vpop.trf.xlu0
    %v816 = vpop.trf.xlu0
    %v817 = vpop.trf.xlu0
    %v818 = vpop.trf.xlu0
    %v819 = vpop.trf.xlu0
    %v820 = vpop.trf.xlu0
    %v821 = vpop.trf.xlu0
    %822 = vxpose.xlu0.b32.start [1/16] %v402, 128
    %823 = vxpose.xlu0.b32.cont [2/16] 0.0, 128
    %824 = vxpose.xlu0.b32.cont [3/16] 0.0, 128
    %825 = vxpose.xlu0.b32.cont [4/16] 0.0, 128
    %826 = vxpose.xlu0.b32.cont [5/16] 0.0, 128
    %827 = vxpose.xlu0.b32.cont [6/16] 0.0, 128
    %828 = vxpose.xlu0.b32.cont [7/16] 0.0, 128
    %829 = vxpose.xlu0.b32.cont [8/16] 0.0, 128
    %830 = vxpose.xlu0.b32.cont [9/16] 0.0, 128
    %831 = vxpose.xlu0.b32.cont [10/16] 0.0, 128
    %832 = vxpose.xlu0.b32.cont [11/16] 0.0, 128
    %833 = vxpose.xlu0.b32.cont [12/16] 0.0, 128
    %834 = vxpose.xlu0.b32.cont [13/16] 0.0, 128
    %835 = vxpose.xlu0.b32.cont [14/16] 0.0, 128
    %836 = vxpose.xlu0.b32.cont [15/16] 0.0, 128
    %837 = vxpose.xlu0.b32.end [16/16] 0.0, 128
    %v838 = vpop.trf.xlu0
    %v839 = vpop.trf.xlu0
    %v840 = vpop.trf.xlu0
    %v841 = vpop.trf.xlu0
    %v842 = vpop.trf.xlu0
    %v843 = vpop.trf.xlu0
    %v844 = vpop.trf.xlu0
    %v845 = vpop.trf.xlu0
    %v846 = vpop.trf.xlu0
    %v847 = vpop.trf.xlu0
    %v848 = vpop.trf.xlu0
    %v849 = vpop.trf.xlu0
    %v850 = vpop.trf.xlu0
    %v851 = vpop.trf.xlu0
    %v852 = vpop.trf.xlu0
    %v853 = vpop.trf.xlu0
    %854 = vxpose.xlu0.b32.start [1/16] %v426, 128
    %855 = vxpose.xlu0.b32.cont [2/16] 0.0, 128
    %856 = vxpose.xlu0.b32.cont [3/16] 0.0, 128
    %857 = vxpose.xlu0.b32.cont [4/16] 0.0, 128
    %858 = vxpose.xlu0.b32.cont [5/16] 0.0, 128
    %859 = vxpose.xlu0.b32.cont [6/16] 0.0, 128
    %860 = vxpose.xlu0.b32.cont [7/16] 0.0, 128
    %861 = vxpose.xlu0.b32.cont [8/16] 0.0, 128
    %862 = vxpose.xlu0.b32.cont [9/16] 0.0, 128
    %863 = vxpose.xlu0.b32.cont [10/16] 0.0, 128
    %864 = vxpose.xlu0.b32.cont [11/16] 0.0, 128
    %865 = vxpose.xlu0.b32.cont [12/16] 0.0, 128
    %866 = vxpose.xlu0.b32.cont [13/16] 0.0, 128
    %867 = vxpose.xlu0.b32.cont [14/16] 0.0, 128
    %868 = vxpose.xlu0.b32.cont [15/16] 0.0, 128
    %869 = vxpose.xlu0.b32.end [16/16] 0.0, 128
    %v870 = vpop.trf.xlu0
    %v871 = vpop.trf.xlu0
    %v872 = vpop.trf.xlu0
    %v873 = vpop.trf.xlu0
    %v874 = vpop.trf.xlu0
    %v875 = vpop.trf.xlu0
    %v876 = vpop.trf.xlu0
    %v877 = vpop.trf.xlu0
    %v878 = vpop.trf.xlu0
    %v879 = vpop.trf.xlu0
    %v880 = vpop.trf.xlu0
    %v881 = vpop.trf.xlu0
    %v882 = vpop.trf.xlu0
    %v883 = vpop.trf.xlu0
    %v884 = vpop.trf.xlu0
    %v885 = vpop.trf.xlu0
    %886 = vxpose.xlu0.b32.start [1/16] %v409, 128
    %887 = vxpose.xlu0.b32.cont [2/16] 0.0, 128
    %888 = vxpose.xlu0.b32.cont [3/16] 0.0, 128
    %889 = vxpose.xlu0.b32.cont [4/16] 0.0, 128
    %890 = vxpose.xlu0.b32.cont [5/16] 0.0, 128
    %891 = vxpose.xlu0.b32.cont [6/16] 0.0, 128
    %892 = vxpose.xlu0.b32.cont [7/16] 0.0, 128
    %893 = vxpose.xlu0.b32.cont [8/16] 0.0, 128
    %894 = vxpose.xlu0.b32.cont [9/16] 0.0, 128
    %895 = vxpose.xlu0.b32.cont [10/16] 0.0, 128
    %896 = vxpose.xlu0.b32.cont [11/16] 0.0, 128
    %897 = vxpose.xlu0.b32.cont [12/16] 0.0, 128
    %898 = vxpose.xlu0.b32.cont [13/16] 0.0, 128
    %899 = vxpose.xlu0.b32.cont [14/16] 0.0, 128
    %900 = vxpose.xlu0.b32.cont [15/16] 0.0, 128
    %901 = vxpose.xlu0.b32.end [16/16] 0.0, 128
    %v902 = vpop.trf.xlu0
    %v903 = vpop.trf.xlu0
    %v904 = vpop.trf.xlu0
    %v905 = vpop.trf.xlu0
    %v906 = vpop.trf.xlu0
    %v907 = vpop.trf.xlu0
    %v908 = vpop.trf.xlu0
    %v909 = vpop.trf.xlu0
    %v910 = vpop.trf.xlu0
    %v911 = vpop.trf.xlu0
    %v912 = vpop.trf.xlu0
    %v913 = vpop.trf.xlu0
    %v914 = vpop.trf.xlu0
    %v915 = vpop.trf.xlu0
    %v916 = vpop.trf.xlu0
    %v917 = vpop.trf.xlu0
    %918 = vxpose.xlu0.b32.start [1/16] %v427, 128
    %919 = vxpose.xlu0.b32.cont [2/16] 0.0, 128
    %920 = vxpose.xlu0.b32.cont [3/16] 0.0, 128
    %921 = vxpose.xlu0.b32.cont [4/16] 0.0, 128
    %922 = vxpose.xlu0.b32.cont [5/16] 0.0, 128
    %923 = vxpose.xlu0.b32.cont [6/16] 0.0, 128
    %924 = vxpose.xlu0.b32.cont [7/16] 0.0, 128
    %925 = vxpose.xlu0.b32.cont [8/16] 0.0, 128
    %926 = vxpose.xlu0.b32.cont [9/16] 0.0, 128
    %927 = vxpose.xlu0.b32.cont [10/16] 0.0, 128
    %928 = vxpose.xlu0.b32.cont [11/16] 0.0, 128
    %929 = vxpose.xlu0.b32.cont [12/16] 0.0, 128
    %930 = vxpose.xlu0.b32.cont [13/16] 0.0, 128
    %931 = vxpose.xlu0.b32.cont [14/16] 0.0, 128
    %932 = vxpose.xlu0.b32.cont [15/16] 0.0, 128
    %933 = vxpose.xlu0.b32.end [16/16] 0.0, 128
    %v934 = vpop.trf.xlu0
    %v935 = vpop.trf.xlu0
    %v936 = vpop.trf.xlu0
    %v937 = vpop.trf.xlu0
    %v938 = vpop.trf.xlu0
    %v939 = vpop.trf.xlu0
    %v940 = vpop.trf.xlu0
    %v941 = vpop.trf.xlu0
    %v942 = vpop.trf.xlu0
    %v943 = vpop.trf.xlu0
    %v944 = vpop.trf.xlu0
    %v945 = vpop.trf.xlu0
    %v946 = vpop.trf.xlu0
    %v947 = vpop.trf.xlu0
    %v948 = vpop.trf.xlu0
    %v949 = vpop.trf.xlu0
    %950 = vxpose.xlu0.b32.start [1/16] %v418, 128
    %951 = vxpose.xlu0.b32.cont [2/16] 0.0, 128
    %952 = vxpose.xlu0.b32.cont [3/16] 0.0, 128
    %953 = vxpose.xlu0.b32.cont [4/16] 0.0, 128
    %954 = vxpose.xlu0.b32.cont [5/16] 0.0, 128
    %955 = vxpose.xlu0.b32.cont [6/16] 0.0, 128
    %956 = vxpose.xlu0.b32.cont [7/16] 0.0, 128
    %957 = vxpose.xlu0.b32.cont [8/16] 0.0, 128
    %958 = vxpose.xlu0.b32.cont [9/16] 0.0, 128
    %959 = vxpose.xlu0.b32.cont [10/16] 0.0, 128
    %960 = vxpose.xlu0.b32.cont [11/16] 0.0, 128
    %961 = vxpose.xlu0.b32.cont [12/16] 0.0, 128
    %962 = vxpose.xlu0.b32.cont [13/16] 0.0, 128
    %963 = vxpose.xlu0.b32.cont [14/16] 0.0, 128
    %964 = vxpose.xlu0.b32.cont [15/16] 0.0, 128
    %965 = vxpose.xlu0.b32.end [16/16] 0.0, 128
    %v966 = vpop.trf.xlu0
    %v967 = vpop.trf.xlu0
    %v968 = vpop.trf.xlu0
    %v969 = vpop.trf.xlu0
    %v970 = vpop.trf.xlu0
    %v971 = vpop.trf.xlu0
    %v972 = vpop.trf.xlu0
    %v973 = vpop.trf.xlu0
    %v974 = vpop.trf.xlu0
    %v975 = vpop.trf.xlu0
    %v976 = vpop.trf.xlu0
    %v977 = vpop.trf.xlu0
    %v978 = vpop.trf.xlu0
    %v979 = vpop.trf.xlu0
    %v980 = vpop.trf.xlu0
    %v981 = vpop.trf.xlu0
    %982 = vxpose.xlu0.b32.start [1/16] %v428, 128
    %983 = vxpose.xlu0.b32.cont [2/16] 0.0, 128
    %984 = vxpose.xlu0.b32.cont [3/16] 0.0, 128
    %985 = vxpose.xlu0.b32.cont [4/16] 0.0, 128
    %986 = vxpose.xlu0.b32.cont [5/16] 0.0, 128
    %987 = vxpose.xlu0.b32.cont [6/16] 0.0, 128
    %988 = vxpose.xlu0.b32.cont [7/16] 0.0, 128
    %989 = vxpose.xlu0.b32.cont [8/16] 0.0, 128
    %990 = vxpose.xlu0.b32.cont [9/16] 0.0, 128
    %991 = vxpose.xlu0.b32.cont [10/16] 0.0, 128
    %992 = vxpose.xlu0.b32.cont [11/16] 0.0, 128
    %993 = vxpose.xlu0.b32.cont [12/16] 0.0, 128
    %994 = vxpose.xlu0.b32.cont [13/16] 0.0, 128
    %995 = vxpose.xlu0.b32.cont [14/16] 0.0, 128
    %996 = vxpose.xlu0.b32.cont [15/16] 0.0, 128
    %997 = vxpose.xlu0.b32.end [16/16] 0.0, 128
    %v998 = vpop.trf.xlu0
    %v999 = vpop.trf.xlu0
    %v1000 = vpop.trf.xlu0
    %v1001 = vpop.trf.xlu0
    %v1002 = vpop.trf.xlu0
    %v1003 = vpop.trf.xlu0
    %v1004 = vpop.trf.xlu0
    %v1005 = vpop.trf.xlu0
    %v1006 = vpop.trf.xlu0
    %v1007 = vpop.trf.xlu0
    %v1008 = vpop.trf.xlu0
    %v1009 = vpop.trf.xlu0
    %v1010 = vpop.trf.xlu0
    %v1011 = vpop.trf.xlu0
    %v1012 = vpop.trf.xlu0
    %v1013 = vpop.trf.xlu0
    %1014 = vxpose.xlu0.b32.start [1/16] %v425, 128
    %1015 = vxpose.xlu0.b32.cont [2/16] 0.0, 128
    %1016 = vxpose.xlu0.b32.cont [3/16] 0.0, 128
    %1017 = vxpose.xlu0.b32.cont [4/16] 0.0, 128
    %1018 = vxpose.xlu0.b32.cont [5/16] 0.0, 128
    %1019 = vxpose.xlu0.b32.cont [6/16] 0.0, 128
    %1020 = vxpose.xlu0.b32.cont [7/16] 0.0, 128
    %1021 = vxpose.xlu0.b32.cont [8/16] 0.0, 128
    %1022 = vxpose.xlu0.b32.cont [9/16] 0.0, 128
    %1023 = vxpose.xlu0.b32.cont [10/16] 0.0, 128
    %1024 = vxpose.xlu0.b32.cont [11/16] 0.0, 128
    %1025 = vxpose.xlu0.b32.cont [12/16] 0.0, 128
    %1026 = vxpose.xlu0.b32.cont [13/16] 0.0, 128
    %1027 = vxpose.xlu0.b32.cont [14/16] 0.0, 128
    %1028 = vxpose.xlu0.b32.cont [15/16] 0.0, 128
    %1029 = vxpose.xlu0.b32.end [16/16] 0.0, 128
    %v1030 = vpop.trf.xlu0
    %v1031 = vpop.trf.xlu0
    %v1032 = vpop.trf.xlu0
    %v1033 = vpop.trf.xlu0
    %v1034 = vpop.trf.xlu0
    %v1035 = vpop.trf.xlu0
    %v1036 = vpop.trf.xlu0
    %v1037 = vpop.trf.xlu0
    %v1038 = vpop.trf.xlu0
    %v1039 = vpop.trf.xlu0
    %v1040 = vpop.trf.xlu0
    %v1041 = vpop.trf.xlu0
    %v1042 = vpop.trf.xlu0
    %v1043 = vpop.trf.xlu0
    %v1044 = vpop.trf.xlu0
    %v1045 = vpop.trf.xlu0
    %1046 = vxpose.xlu0.b32.start [1/16] %v429, 128
    %1047 = vxpose.xlu0.b32.cont [2/16] 0.0, 128
    %1048 = vxpose.xlu0.b32.cont [3/16] 0.0, 128
    %1049 = vxpose.xlu0.b32.cont [4/16] 0.0, 128
    %1050 = vxpose.xlu0.b32.cont [5/16] 0.0, 128
    %1051 = vxpose.xlu0.b32.cont [6/16] 0.0, 128
    %1052 = vxpose.xlu0.b32.cont [7/16] 0.0, 128
    %1053 = vxpose.xlu0.b32.cont [8/16] 0.0, 128
    %1054 = vxpose.xlu0.b32.cont [9/16] 0.0, 128
    %1055 = vxpose.xlu0.b32.cont [10/16] 0.0, 128
    %1056 = vxpose.xlu0.b32.cont [11/16] 0.0, 128
    %1057 = vxpose.xlu0.b32.cont [12/16] 0.0, 128
    %1058 = vxpose.xlu0.b32.cont [13/16] 0.0, 128
    %1059 = vxpose.xlu0.b32.cont [14/16] 0.0, 128
    %1060 = vxpose.xlu0.b32.cont [15/16] 0.0, 128
    %1061 = vxpose.xlu0.b32.end [16/16] 0.0, 128
    %v1062 = vpop.trf.xlu0
    %v1063 = vpop.trf.xlu0
    %v1064 = vpop.trf.xlu0
    %v1065 = vpop.trf.xlu0
    %v1066 = vpop.trf.xlu0
    %v1067 = vpop.trf.xlu0
    %v1068 = vpop.trf.xlu0
    %v1069 = vpop.trf.xlu0
    %v1070 = vpop.trf.xlu0
    %v1071 = vpop.trf.xlu0
    %v1072 = vpop.trf.xlu0
    %v1073 = vpop.trf.xlu0
    %v1074 = vpop.trf.xlu0
    %v1075 = vpop.trf.xlu0
    %v1076 = vpop.trf.xlu0
    %v1077 = vpop.trf.xlu0
    %1078 = vxpose.xlu0.b32.start [1/16] %v470, 128
    %1079 = vxpose.xlu0.b32.cont [2/16] 0.0, 128
    %1080 = vxpose.xlu0.b32.cont [3/16] 0.0, 128
    %1081 = vxpose.xlu0.b32.cont [4/16] 0.0, 128
    %1082 = vxpose.xlu0.b32.cont [5/16] 0.0, 128
    %1083 = vxpose.xlu0.b32.cont [6/16] 0.0, 128
    %1084 = vxpose.xlu0.b32.cont [7/16] 0.0, 128
    %1085 = vxpose.xlu0.b32.cont [8/16] 0.0, 128
    %1086 = vxpose.xlu0.b32.cont [9/16] 0.0, 128
    %1087 = vxpose.xlu0.b32.cont [10/16] 0.0, 128
    %1088 = vxpose.xlu0.b32.cont [11/16] 0.0, 128
    %1089 = vxpose.xlu0.b32.cont [12/16] 0.0, 128
    %1090 = vxpose.xlu0.b32.cont [13/16] 0.0, 128
    %1091 = vxpose.xlu0.b32.cont [14/16] 0.0, 128
    %1092 = vxpose.xlu0.b32.cont [15/16] 0.0, 128
    %1093 = vxpose.xlu0.b32.end [16/16] 0.0, 128
    %v1094 = vpop.trf.xlu0
    %v1095 = vpop.trf.xlu0
    %v1096 = vpop.trf.xlu0
    %v1097 = vpop.trf.xlu0
    %v1098 = vpop.trf.xlu0
    %v1099 = vpop.trf.xlu0
    %v1100 = vpop.trf.xlu0
    %v1101 = vpop.trf.xlu0
    %v1102 = vpop.trf.xlu0
    %v1103 = vpop.trf.xlu0
    %v1104 = vpop.trf.xlu0
    %v1105 = vpop.trf.xlu0
    %v1106 = vpop.trf.xlu0
    %v1107 = vpop.trf.xlu0
    %v1108 = vpop.trf.xlu0
    %v1109 = vpop.trf.xlu0
    %1110 = vxpose.xlu0.b32.start [1/16] %v494, 128
    %1111 = vxpose.xlu0.b32.cont [2/16] 0.0, 128
    %1112 = vxpose.xlu0.b32.cont [3/16] 0.0, 128
    %1113 = vxpose.xlu0.b32.cont [4/16] 0.0, 128
    %1114 = vxpose.xlu0.b32.cont [5/16] 0.0, 128
    %1115 = vxpose.xlu0.b32.cont [6/16] 0.0, 128
    %1116 = vxpose.xlu0.b32.cont [7/16] 0.0, 128
    %1117 = vxpose.xlu0.b32.cont [8/16] 0.0, 128
    %1118 = vxpose.xlu0.b32.cont [9/16] 0.0, 128
    %1119 = vxpose.xlu0.b32.cont [10/16] 0.0, 128
    %1120 = vxpose.xlu0.b32.cont [11/16] 0.0, 128
    %1121 = vxpose.xlu0.b32.cont [12/16] 0.0, 128
    %1122 = vxpose.xlu0.b32.cont [13/16] 0.0, 128
    %1123 = vxpose.xlu0.b32.cont [14/16] 0.0, 128
    %1124 = vxpose.xlu0.b32.cont [15/16] 0.0, 128
    %1125 = vxpose.xlu0.b32.end [16/16] 0.0, 128
    %v1126 = vpop.trf.xlu0
    %v1127 = vpop.trf.xlu0
    %v1128 = vpop.trf.xlu0
    %v1129 = vpop.trf.xlu0
    %v1130 = vpop.trf.xlu0
    %v1131 = vpop.trf.xlu0
    %v1132 = vpop.trf.xlu0
    %v1133 = vpop.trf.xlu0
    %v1134 = vpop.trf.xlu0
    %v1135 = vpop.trf.xlu0
    %v1136 = vpop.trf.xlu0
    %v1137 = vpop.trf.xlu0
    %v1138 = vpop.trf.xlu0
    %v1139 = vpop.trf.xlu0
    %v1140 = vpop.trf.xlu0
    %v1141 = vpop.trf.xlu0
    %1142 = vxpose.xlu0.b32.start [1/16] %v477, 128
    %1143 = vxpose.xlu0.b32.cont [2/16] 0.0, 128
    %1144 = vxpose.xlu0.b32.cont [3/16] 0.0, 128
    %1145 = vxpose.xlu0.b32.cont [4/16] 0.0, 128
    %1146 = vxpose.xlu0.b32.cont [5/16] 0.0, 128
    %1147 = vxpose.xlu0.b32.cont [6/16] 0.0, 128
    %1148 = vxpose.xlu0.b32.cont [7/16] 0.0, 128
    %1149 = vxpose.xlu0.b32.cont [8/16] 0.0, 128
    %1150 = vxpose.xlu0.b32.cont [9/16] 0.0, 128
    %1151 = vxpose.xlu0.b32.cont [10/16] 0.0, 128
    %1152 = vxpose.xlu0.b32.cont [11/16] 0.0, 128
    %1153 = vxpose.xlu0.b32.cont [12/16] 0.0, 128
    %1154 = vxpose.xlu0.b32.cont [13/16] 0.0, 128
    %1155 = vxpose.xlu0.b32.cont [14/16] 0.0, 128
    %1156 = vxpose.xlu0.b32.cont [15/16] 0.0, 128
    %1157 = vxpose.xlu0.b32.end [16/16] 0.0, 128
    %v1158 = vpop.trf.xlu0
    %v1159 = vpop.trf.xlu0
    %v1160 = vpop.trf.xlu0
    %v1161 = vpop.trf.xlu0
    %v1162 = vpop.trf.xlu0
    %v1163 = vpop.trf.xlu0
    %v1164 = vpop.trf.xlu0
    %v1165 = vpop.trf.xlu0
    %v1166 = vpop.trf.xlu0
    %v1167 = vpop.trf.xlu0
    %v1168 = vpop.trf.xlu0
    %v1169 = vpop.trf.xlu0
    %v1170 = vpop.trf.xlu0
    %v1171 = vpop.trf.xlu0
    %v1172 = vpop.trf.xlu0
    %v1173 = vpop.trf.xlu0
    %1174 = vxpose.xlu0.b32.start [1/16] %v495, 128
    %1175 = vxpose.xlu0.b32.cont [2/16] 0.0, 128
    %1176 = vxpose.xlu0.b32.cont [3/16] 0.0, 128
    %1177 = vxpose.xlu0.b32.cont [4/16] 0.0, 128
    %1178 = vxpose.xlu0.b32.cont [5/16] 0.0, 128
    %1179 = vxpose.xlu0.b32.cont [6/16] 0.0, 128
    %1180 = vxpose.xlu0.b32.cont [7/16] 0.0, 128
    %1181 = vxpose.xlu0.b32.cont [8/16] 0.0, 128
    %1182 = vxpose.xlu0.b32.cont [9/16] 0.0, 128
    %1183 = vxpose.xlu0.b32.cont [10/16] 0.0, 128
    %1184 = vxpose.xlu0.b32.cont [11/16] 0.0, 128
    %1185 = vxpose.xlu0.b32.cont [12/16] 0.0, 128
    %1186 = vxpose.xlu0.b32.cont [13/16] 0.0, 128
    %1187 = vxpose.xlu0.b32.cont [14/16] 0.0, 128
    %1188 = vxpose.xlu0.b32.cont [15/16] 0.0, 128
    %1189 = vxpose.xlu0.b32.end [16/16] 0.0, 128
    %v1190 = vpop.trf.xlu0
    %v1191 = vpop.trf.xlu0
    %v1192 = vpop.trf.xlu0
    %v1193 = vpop.trf.xlu0
    %v1194 = vpop.trf.xlu0
    %v1195 = vpop.trf.xlu0
    %v1196 = vpop.trf.xlu0
    %v1197 = vpop.trf.xlu0
    %v1198 = vpop.trf.xlu0
    %v1199 = vpop.trf.xlu0
    %v1200 = vpop.trf.xlu0
    %v1201 = vpop.trf.xlu0
    %v1202 = vpop.trf.xlu0
    %v1203 = vpop.trf.xlu0
    %v1204 = vpop.trf.xlu0
    %v1205 = vpop.trf.xlu0
    %1206 = vxpose.xlu0.b32.start [1/16] %v486, 128
    %1207 = vxpose.xlu0.b32.cont [2/16] 0.0, 128
    %1208 = vxpose.xlu0.b32.cont [3/16] 0.0, 128
    %1209 = vxpose.xlu0.b32.cont [4/16] 0.0, 128
    %1210 = vxpose.xlu0.b32.cont [5/16] 0.0, 128
    %1211 = vxpose.xlu0.b32.cont [6/16] 0.0, 128
    %1212 = vxpose.xlu0.b32.cont [7/16] 0.0, 128
    %1213 = vxpose.xlu0.b32.cont [8/16] 0.0, 128
    %1214 = vxpose.xlu0.b32.cont [9/16] 0.0, 128
    %1215 = vxpose.xlu0.b32.cont [10/16] 0.0, 128
    %1216 = vxpose.xlu0.b32.cont [11/16] 0.0, 128
    %1217 = vxpose.xlu0.b32.cont [12/16] 0.0, 128
    %1218 = vxpose.xlu0.b32.cont [13/16] 0.0, 128
    %1219 = vxpose.xlu0.b32.cont [14/16] 0.0, 128
    %1220 = vxpose.xlu0.b32.cont [15/16] 0.0, 128
    %1221 = vxpose.xlu0.b32.end [16/16] 0.0, 128
    %v1222 = vpop.trf.xlu0
    %v1223 = vpop.trf.xlu0
    %v1224 = vpop.trf.xlu0
    %v1225 = vpop.trf.xlu0
    %v1226 = vpop.trf.xlu0
    %v1227 = vpop.trf.xlu0
    %v1228 = vpop.trf.xlu0
    %v1229 = vpop.trf.xlu0
    %v1230 = vpop.trf.xlu0
    %v1231 = vpop.trf.xlu0
    %v1232 = vpop.trf.xlu0
    %v1233 = vpop.trf.xlu0
    %v1234 = vpop.trf.xlu0
    %v1235 = vpop.trf.xlu0
    %v1236 = vpop.trf.xlu0
    %v1237 = vpop.trf.xlu0
    %1238 = vxpose.xlu0.b32.start [1/16] %v496, 128
    %1239 = vxpose.xlu0.b32.cont [2/16] 0.0, 128
    %1240 = vxpose.xlu0.b32.cont [3/16] 0.0, 128
    %1241 = vxpose.xlu0.b32.cont [4/16] 0.0, 128
    %1242 = vxpose.xlu0.b32.cont [5/16] 0.0, 128
    %1243 = vxpose.xlu0.b32.cont [6/16] 0.0, 128
    %1244 = vxpose.xlu0.b32.cont [7/16] 0.0, 128
    %1245 = vxpose.xlu0.b32.cont [8/16] 0.0, 128
    %1246 = vxpose.xlu0.b32.cont [9/16] 0.0, 128
    %1247 = vxpose.xlu0.b32.cont [10/16] 0.0, 128
    %1248 = vxpose.xlu0.b32.cont [11/16] 0.0, 128
    %1249 = vxpose.xlu0.b32.cont [12/16] 0.0, 128
    %1250 = vxpose.xlu0.b32.cont [13/16] 0.0, 128
    %1251 = vxpose.xlu0.b32.cont [14/16] 0.0, 128
    %1252 = vxpose.xlu0.b32.cont [15/16] 0.0, 128
    %1253 = vxpose.xlu0.b32.end [16/16] 0.0, 128
    %v1254 = vpop.trf.xlu0
    %v1255 = vpop.trf.xlu0
    %v1256 = vpop.trf.xlu0
    %v1257 = vpop.trf.xlu0
    %v1258 = vpop.trf.xlu0
    %v1259 = vpop.trf.xlu0
    %v1260 = vpop.trf.xlu0
    %v1261 = vpop.trf.xlu0
    %v1262 = vpop.trf.xlu0
    %v1263 = vpop.trf.xlu0
    %v1264 = vpop.trf.xlu0
    %v1265 = vpop.trf.xlu0
    %v1266 = vpop.trf.xlu0
    %v1267 = vpop.trf.xlu0
    %v1268 = vpop.trf.xlu0
    %v1269 = vpop.trf.xlu0
    %1270 = vxpose.xlu0.b32.start [1/16] %v493, 128
    %1271 = vxpose.xlu0.b32.cont [2/16] 0.0, 128
    %1272 = vxpose.xlu0.b32.cont [3/16] 0.0, 128
    %1273 = vxpose.xlu0.b32.cont [4/16] 0.0, 128
    %1274 = vxpose.xlu0.b32.cont [5/16] 0.0, 128
    %1275 = vxpose.xlu0.b32.cont [6/16] 0.0, 128
    %1276 = vxpose.xlu0.b32.cont [7/16] 0.0, 128
    %1277 = vxpose.xlu0.b32.cont [8/16] 0.0, 128
    %1278 = vxpose.xlu0.b32.cont [9/16] 0.0, 128
    %1279 = vxpose.xlu0.b32.cont [10/16] 0.0, 128
    %1280 = vxpose.xlu0.b32.cont [11/16] 0.0, 128
    %1281 = vxpose.xlu0.b32.cont [12/16] 0.0, 128
    %1282 = vxpose.xlu0.b32.cont [13/16] 0.0, 128
    %1283 = vxpose.xlu0.b32.cont [14/16] 0.0, 128
    %1284 = vxpose.xlu0.b32.cont [15/16] 0.0, 128
    %1285 = vxpose.xlu0.b32.end [16/16] 0.0, 128
    %v1286 = vpop.trf.xlu0
    %v1287 = vpop.trf.xlu0
    %v1288 = vpop.trf.xlu0
    %v1289 = vpop.trf.xlu0
    %v1290 = vpop.trf.xlu0
    %v1291 = vpop.trf.xlu0
    %v1292 = vpop.trf.xlu0
    %v1293 = vpop.trf.xlu0
    %v1294 = vpop.trf.xlu0
    %v1295 = vpop.trf.xlu0
    %v1296 = vpop.trf.xlu0
    %v1297 = vpop.trf.xlu0
    %v1298 = vpop.trf.xlu0
    %v1299 = vpop.trf.xlu0
    %v1300 = vpop.trf.xlu0
    %v1301 = vpop.trf.xlu0
    %1302 = vxpose.xlu0.b32.start [1/16] %v497, 128
    %1303 = vxpose.xlu0.b32.cont [2/16] 0.0, 128
    %1304 = vxpose.xlu0.b32.cont [3/16] 0.0, 128
    %1305 = vxpose.xlu0.b32.cont [4/16] 0.0, 128
    %1306 = vxpose.xlu0.b32.cont [5/16] 0.0, 128
    %1307 = vxpose.xlu0.b32.cont [6/16] 0.0, 128
    %1308 = vxpose.xlu0.b32.cont [7/16] 0.0, 128
    %1309 = vxpose.xlu0.b32.cont [8/16] 0.0, 128
    %1310 = vxpose.xlu0.b32.cont [9/16] 0.0, 128
    %1311 = vxpose.xlu0.b32.cont [10/16] 0.0, 128
    %1312 = vxpose.xlu0.b32.cont [11/16] 0.0, 128
    %1313 = vxpose.xlu0.b32.cont [12/16] 0.0, 128
    %1314 = vxpose.xlu0.b32.cont [13/16] 0.0, 128
    %1315 = vxpose.xlu0.b32.cont [14/16] 0.0, 128
    %1316 = vxpose.xlu0.b32.cont [15/16] 0.0, 128
    %1317 = vxpose.xlu0.b32.end [16/16] 0.0, 128
    %v1318 = vpop.trf.xlu0
    %v1319 = vpop.trf.xlu0
    %v1320 = vpop.trf.xlu0
    %v1321 = vpop.trf.xlu0
    %v1322 = vpop.trf.xlu0
    %v1323 = vpop.trf.xlu0
    %v1324 = vpop.trf.xlu0
    %v1325 = vpop.trf.xlu0
    %v1326 = vpop.trf.xlu0
    %v1327 = vpop.trf.xlu0
    %v1328 = vpop.trf.xlu0
    %v1329 = vpop.trf.xlu0
    %v1330 = vpop.trf.xlu0
    %v1331 = vpop.trf.xlu0
    %v1332 = vpop.trf.xlu0
    %v1333 = vpop.trf.xlu0
    %1334 = vxpose.xlu0.b32.start [1/16] %v538, 128
    %1335 = vxpose.xlu0.b32.cont [2/16] 0.0, 128
    %1336 = vxpose.xlu0.b32.cont [3/16] 0.0, 128
    %1337 = vxpose.xlu0.b32.cont [4/16] 0.0, 128
    %1338 = vxpose.xlu0.b32.cont [5/16] 0.0, 128
    %1339 = vxpose.xlu0.b32.cont [6/16] 0.0, 128
    %1340 = vxpose.xlu0.b32.cont [7/16] 0.0, 128
    %1341 = vxpose.xlu0.b32.cont [8/16] 0.0, 128
    %1342 = vxpose.xlu0.b32.cont [9/16] 0.0, 128
    %1343 = vxpose.xlu0.b32.cont [10/16] 0.0, 128
    %1344 = vxpose.xlu0.b32.cont [11/16] 0.0, 128
    %1345 = vxpose.xlu0.b32.cont [12/16] 0.0, 128
    %1346 = vxpose.xlu0.b32.cont [13/16] 0.0, 128
    %1347 = vxpose.xlu0.b32.cont [14/16] 0.0, 128
    %1348 = vxpose.xlu0.b32.cont [15/16] 0.0, 128
    %1349 = vxpose.xlu0.b32.end [16/16] 0.0, 128
    %v1350 = vpop.trf.xlu0
    %v1351 = vpop.trf.xlu0
    %v1352 = vpop.trf.xlu0
    %v1353 = vpop.trf.xlu0
    %v1354 = vpop.trf.xlu0
    %v1355 = vpop.trf.xlu0
    %v1356 = vpop.trf.xlu0
    %v1357 = vpop.trf.xlu0
    %v1358 = vpop.trf.xlu0
    %v1359 = vpop.trf.xlu0
    %v1360 = vpop.trf.xlu0
    %v1361 = vpop.trf.xlu0
    %v1362 = vpop.trf.xlu0
    %v1363 = vpop.trf.xlu0
    %v1364 = vpop.trf.xlu0
    %v1365 = vpop.trf.xlu0
    %1366 = vxpose.xlu0.b32.start [1/16] %v562, 128
    %1367 = vxpose.xlu0.b32.cont [2/16] 0.0, 128
    %1368 = vxpose.xlu0.b32.cont [3/16] 0.0, 128
    %1369 = vxpose.xlu0.b32.cont [4/16] 0.0, 128
    %1370 = vxpose.xlu0.b32.cont [5/16] 0.0, 128
    %1371 = vxpose.xlu0.b32.cont [6/16] 0.0, 128
    %1372 = vxpose.xlu0.b32.cont [7/16] 0.0, 128
    %1373 = vxpose.xlu0.b32.cont [8/16] 0.0, 128
    %1374 = vxpose.xlu0.b32.cont [9/16] 0.0, 128
    %1375 = vxpose.xlu0.b32.cont [10/16] 0.0, 128
    %1376 = vxpose.xlu0.b32.cont [11/16] 0.0, 128
    %1377 = vxpose.xlu0.b32.cont [12/16] 0.0, 128
    %1378 = vxpose.xlu0.b32.cont [13/16] 0.0, 128
    %1379 = vxpose.xlu0.b32.cont [14/16] 0.0, 128
    %1380 = vxpose.xlu0.b32.cont [15/16] 0.0, 128
    %1381 = vxpose.xlu0.b32.end [16/16] 0.0, 128
    %v1382 = vpop.trf.xlu0
    %v1383 = vpop.trf.xlu0
    %v1384 = vpop.trf.xlu0
    %v1385 = vpop.trf.xlu0
    %v1386 = vpop.trf.xlu0
    %v1387 = vpop.trf.xlu0
    %v1388 = vpop.trf.xlu0
    %v1389 = vpop.trf.xlu0
    %v1390 = vpop.trf.xlu0
    %v1391 = vpop.trf.xlu0
    %v1392 = vpop.trf.xlu0
    %v1393 = vpop.trf.xlu0
    %v1394 = vpop.trf.xlu0
    %v1395 = vpop.trf.xlu0
    %v1396 = vpop.trf.xlu0
    %v1397 = vpop.trf.xlu0
    %1398 = vxpose.xlu0.b32.start [1/16] %v545, 128
    %1399 = vxpose.xlu0.b32.cont [2/16] 0.0, 128
    %1400 = vxpose.xlu0.b32.cont [3/16] 0.0, 128
    %1401 = vxpose.xlu0.b32.cont [4/16] 0.0, 128
    %1402 = vxpose.xlu0.b32.cont [5/16] 0.0, 128
    %1403 = vxpose.xlu0.b32.cont [6/16] 0.0, 128
    %1404 = vxpose.xlu0.b32.cont [7/16] 0.0, 128
    %1405 = vxpose.xlu0.b32.cont [8/16] 0.0, 128
    %1406 = vxpose.xlu0.b32.cont [9/16] 0.0, 128
    %1407 = vxpose.xlu0.b32.cont [10/16] 0.0, 128
    %1408 = vxpose.xlu0.b32.cont [11/16] 0.0, 128
    %1409 = vxpose.xlu0.b32.cont [12/16] 0.0, 128
    %1410 = vxpose.xlu0.b32.cont [13/16] 0.0, 128
    %1411 = vxpose.xlu0.b32.cont [14/16] 0.0, 128
    %1412 = vxpose.xlu0.b32.cont [15/16] 0.0, 128
    %1413 = vxpose.xlu0.b32.end [16/16] 0.0, 128
    %v1414 = vpop.trf.xlu0
    %v1415 = vpop.trf.xlu0
    %v1416 = vpop.trf.xlu0
    %v1417 = vpop.trf.xlu0
    %v1418 = vpop.trf.xlu0
    %v1419 = vpop.trf.xlu0
    %v1420 = vpop.trf.xlu0
    %v1421 = vpop.trf.xlu0
    %v1422 = vpop.trf.xlu0
    %v1423 = vpop.trf.xlu0
    %v1424 = vpop.trf.xlu0
    %v1425 = vpop.trf.xlu0
    %v1426 = vpop.trf.xlu0
    %v1427 = vpop.trf.xlu0
    %v1428 = vpop.trf.xlu0
    %v1429 = vpop.trf.xlu0
    %1430 = vxpose.xlu0.b32.start [1/16] %v563, 128
    %1431 = vxpose.xlu0.b32.cont [2/16] 0.0, 128
    %1432 = vxpose.xlu0.b32.cont [3/16] 0.0, 128
    %1433 = vxpose.xlu0.b32.cont [4/16] 0.0, 128
    %1434 = vxpose.xlu0.b32.cont [5/16] 0.0, 128
    %1435 = vxpose.xlu0.b32.cont [6/16] 0.0, 128
    %1436 = vxpose.xlu0.b32.cont [7/16] 0.0, 128
    %1437 = vxpose.xlu0.b32.cont [8/16] 0.0, 128
    %1438 = vxpose.xlu0.b32.cont [9/16] 0.0, 128
    %1439 = vxpose.xlu0.b32.cont [10/16] 0.0, 128
    %1440 = vxpose.xlu0.b32.cont [11/16] 0.0, 128
    %1441 = vxpose.xlu0.b32.cont [12/16] 0.0, 128
    %1442 = vxpose.xlu0.b32.cont [13/16] 0.0, 128
    %1443 = vxpose.xlu0.b32.cont [14/16] 0.0, 128
    %1444 = vxpose.xlu0.b32.cont [15/16] 0.0, 128
    %1445 = vxpose.xlu0.b32.end [16/16] 0.0, 128
    %v1446 = vpop.trf.xlu0
    %v1447 = vpop.trf.xlu0
    %v1448 = vpop.trf.xlu0
    %v1449 = vpop.trf.xlu0
    %v1450 = vpop.trf.xlu0
    %v1451 = vpop.trf.xlu0
    %v1452 = vpop.trf.xlu0
    %v1453 = vpop.trf.xlu0
    %v1454 = vpop.trf.xlu0
    %v1455 = vpop.trf.xlu0
    %v1456 = vpop.trf.xlu0
    %v1457 = vpop.trf.xlu0
    %v1458 = vpop.trf.xlu0
    %v1459 = vpop.trf.xlu0
    %v1460 = vpop.trf.xlu0
    %v1461 = vpop.trf.xlu0
    %1462 = vxpose.xlu0.b32.start [1/16] %v554, 128
    %1463 = vxpose.xlu0.b32.cont [2/16] 0.0, 128
    %1464 = vxpose.xlu0.b32.cont [3/16] 0.0, 128
    %1465 = vxpose.xlu0.b32.cont [4/16] 0.0, 128
    %1466 = vxpose.xlu0.b32.cont [5/16] 0.0, 128
    %1467 = vxpose.xlu0.b32.cont [6/16] 0.0, 128
    %1468 = vxpose.xlu0.b32.cont [7/16] 0.0, 128
    %1469 = vxpose.xlu0.b32.cont [8/16] 0.0, 128
    %1470 = vxpose.xlu0.b32.cont [9/16] 0.0, 128
    %1471 = vxpose.xlu0.b32.cont [10/16] 0.0, 128
    %1472 = vxpose.xlu0.b32.cont [11/16] 0.0, 128
    %1473 = vxpose.xlu0.b32.cont [12/16] 0.0, 128
    %1474 = vxpose.xlu0.b32.cont [13/16] 0.0, 128
    %1475 = vxpose.xlu0.b32.cont [14/16] 0.0, 128
    %1476 = vxpose.xlu0.b32.cont [15/16] 0.0, 128
    %1477 = vxpose.xlu0.b32.end [16/16] 0.0, 128
    %v1478 = vpop.trf.xlu0
    %v1479 = vpop.trf.xlu0
    %v1480 = vpop.trf.xlu0
    %v1481 = vpop.trf.xlu0
    %v1482 = vpop.trf.xlu0
    %v1483 = vpop.trf.xlu0
    %v1484 = vpop.trf.xlu0
    %v1485 = vpop.trf.xlu0
    %v1486 = vpop.trf.xlu0
    %v1487 = vpop.trf.xlu0
    %v1488 = vpop.trf.xlu0
    %v1489 = vpop.trf.xlu0
    %v1490 = vpop.trf.xlu0
    %v1491 = vpop.trf.xlu0
    %v1492 = vpop.trf.xlu0
    %v1493 = vpop.trf.xlu0
    %1494 = vxpose.xlu0.b32.start [1/16] %v564, 128
    %1495 = vxpose.xlu0.b32.cont [2/16] 0.0, 128
    %1496 = vxpose.xlu0.b32.cont [3/16] 0.0, 128
    %1497 = vxpose.xlu0.b32.cont [4/16] 0.0, 128
    %1498 = vxpose.xlu0.b32.cont [5/16] 0.0, 128
    %1499 = vxpose.xlu0.b32.cont [6/16] 0.0, 128
    %1500 = vxpose.xlu0.b32.cont [7/16] 0.0, 128
    %1501 = vxpose.xlu0.b32.cont [8/16] 0.0, 128
    %1502 = vxpose.xlu0.b32.cont [9/16] 0.0, 128
    %1503 = vxpose.xlu0.b32.cont [10/16] 0.0, 128
    %1504 = vxpose.xlu0.b32.cont [11/16] 0.0, 128
    %1505 = vxpose.xlu0.b32.cont [12/16] 0.0, 128
    %1506 = vxpose.xlu0.b32.cont [13/16] 0.0, 128
    %1507 = vxpose.xlu0.b32.cont [14/16] 0.0, 128
    %1508 = vxpose.xlu0.b32.cont [15/16] 0.0, 128
    %1509 = vxpose.xlu0.b32.end [16/16] 0.0, 128
    %v1510 = vpop.trf.xlu0
    %v1511 = vpop.trf.xlu0
    %v1512 = vpop.trf.xlu0
    %v1513 = vpop.trf.xlu0
    %v1514 = vpop.trf.xlu0
    %v1515 = vpop.trf.xlu0
    %v1516 = vpop.trf.xlu0
    %v1517 = vpop.trf.xlu0
    %v1518 = vpop.trf.xlu0
    %v1519 = vpop.trf.xlu0
    %v1520 = vpop.trf.xlu0
    %v1521 = vpop.trf.xlu0
    %v1522 = vpop.trf.xlu0
    %v1523 = vpop.trf.xlu0
    %v1524 = vpop.trf.xlu0
    %v1525 = vpop.trf.xlu0
    %1526 = vxpose.xlu0.b32.start [1/16] %v561, 128
    %1527 = vxpose.xlu0.b32.cont [2/16] 0.0, 128
    %1528 = vxpose.xlu0.b32.cont [3/16] 0.0, 128
    %1529 = vxpose.xlu0.b32.cont [4/16] 0.0, 128
    %1530 = vxpose.xlu0.b32.cont [5/16] 0.0, 128
    %1531 = vxpose.xlu0.b32.cont [6/16] 0.0, 128
    %1532 = vxpose.xlu0.b32.cont [7/16] 0.0, 128
    %1533 = vxpose.xlu0.b32.cont [8/16] 0.0, 128
    %1534 = vxpose.xlu0.b32.cont [9/16] 0.0, 128
    %1535 = vxpose.xlu0.b32.cont [10/16] 0.0, 128
    %1536 = vxpose.xlu0.b32.cont [11/16] 0.0, 128
    %1537 = vxpose.xlu0.b32.cont [12/16] 0.0, 128
    %1538 = vxpose.xlu0.b32.cont [13/16] 0.0, 128
    %1539 = vxpose.xlu0.b32.cont [14/16] 0.0, 128
    %1540 = vxpose.xlu0.b32.cont [15/16] 0.0, 128
    %1541 = vxpose.xlu0.b32.end [16/16] 0.0, 128
    %v1542 = vpop.trf.xlu0
    %v1543 = vpop.trf.xlu0
    %v1544 = vpop.trf.xlu0
    %v1545 = vpop.trf.xlu0
    %v1546 = vpop.trf.xlu0
    %v1547 = vpop.trf.xlu0
    %v1548 = vpop.trf.xlu0
    %v1549 = vpop.trf.xlu0
    %v1550 = vpop.trf.xlu0
    %v1551 = vpop.trf.xlu0
    %v1552 = vpop.trf.xlu0
    %v1553 = vpop.trf.xlu0
    %v1554 = vpop.trf.xlu0
    %v1555 = vpop.trf.xlu0
    %v1556 = vpop.trf.xlu0
    %v1557 = vpop.trf.xlu0
    %1558 = vxpose.xlu0.b32.start [1/16] %v565, 128
    %1559 = vxpose.xlu0.b32.cont [2/16] 0.0, 128
    %1560 = vxpose.xlu0.b32.cont [3/16] 0.0, 128
    %1561 = vxpose.xlu0.b32.cont [4/16] 0.0, 128
    %1562 = vxpose.xlu0.b32.cont [5/16] 0.0, 128
    %1563 = vxpose.xlu0.b32.cont [6/16] 0.0, 128
    %1564 = vxpose.xlu0.b32.cont [7/16] 0.0, 128
    %1565 = vxpose.xlu0.b32.cont [8/16] 0.0, 128
    %1566 = vxpose.xlu0.b32.cont [9/16] 0.0, 128
    %1567 = vxpose.xlu0.b32.cont [10/16] 0.0, 128
    %1568 = vxpose.xlu0.b32.cont [11/16] 0.0, 128
    %1569 = vxpose.xlu0.b32.cont [12/16] 0.0, 128
    %1570 = vxpose.xlu0.b32.cont [13/16] 0.0, 128
    %1571 = vxpose.xlu0.b32.cont [14/16] 0.0, 128
    %1572 = vxpose.xlu0.b32.cont [15/16] 0.0, 128
    %1573 = vxpose.xlu0.b32.end [16/16] 0.0, 128
    %v1574 = vpop.trf.xlu0
    %v1575 = vpop.trf.xlu0
    %v1576 = vpop.trf.xlu0
    %v1577 = vpop.trf.xlu0
    %v1578 = vpop.trf.xlu0
    %v1579 = vpop.trf.xlu0
    %v1580 = vpop.trf.xlu0
    %v1581 = vpop.trf.xlu0
    %v1582 = vpop.trf.xlu0
    %v1583 = vpop.trf.xlu0
    %v1584 = vpop.trf.xlu0
    %v1585 = vpop.trf.xlu0
    %v1586 = vpop.trf.xlu0
    %v1587 = vpop.trf.xlu0
    %v1588 = vpop.trf.xlu0
    %v1589 = vpop.trf.xlu0
    %v1590 = vcombine.low %v582, %v646
    %v1591 = vcombine.high %v582, %v646
    %v1593 = vunpack.c.l.s4 1983009808
    %v1594 = vunpack.c.0.s8 %v1593
    %v1595 = vlaneseq
    %v1596 = vshrl.u32 %v1595, 7
    %v1597 = vsub.s32 %v1594, %v1596
    %v1598 = vrot.slane %v1590, %v1597
    %v1600 = vunpack.c.l.s4 1983009808
    %v1601 = vunpack.c.0.s8 %v1600
    %v1602 = vlaneseq
    %v1603 = vshrl.u32 %v1602, 7
    %v1604 = vsub.s32 %v1601, %v1603
    %v1605 = vrot.slane %v1591, %v1604
    %v1606 = vcombine.low %v614, %v678
    %v1607 = vcombine.high %v614, %v678
    %v1609 = vunpack.c.l.s4 1983009808
    %v1610 = vunpack.c.0.s8 %v1609
    %v1611 = vlaneseq
    %v1612 = vshrl.u32 %v1611, 7
    %v1613 = vsub.s32 %v1610, %v1612
    %v1614 = vrot.slane %v1606, %v1613
    %v1616 = vunpack.c.l.s4 1983009808
    %v1617 = vunpack.c.0.s8 %v1616
    %v1618 = vlaneseq
    %v1619 = vshrl.u32 %v1618, 7
    %v1620 = vsub.s32 %v1617, %v1619
    %v1621 = vrot.slane %v1607, %v1620
    %v1622 = vcombine.low %v710, %v774
    %v1623 = vcombine.high %v710, %v774
    %v1625 = vunpack.c.l.s4 1983009808
    %v1626 = vunpack.c.0.s8 %v1625
    %v1627 = vlaneseq
    %v1628 = vshrl.u32 %v1627, 7
    %v1629 = vsub.s32 %v1626, %v1628
    %v1630 = vrot.slane %v1622, %v1629
    %v1632 = vunpack.c.l.s4 1983009808
    %v1633 = vunpack.c.0.s8 %v1632
    %v1634 = vlaneseq
    %v1635 = vshrl.u32 %v1634, 7
    %v1636 = vsub.s32 %v1633, %v1635
    %v1637 = vrot.slane %v1623, %v1636
    %v1638 = vcombine.low %v742, %v806
    %v1639 = vcombine.high %v742, %v806
    %v1641 = vunpack.c.l.s4 1983009808
    %v1642 = vunpack.c.0.s8 %v1641
    %v1643 = vlaneseq
    %v1644 = vshrl.u32 %v1643, 7
    %v1645 = vsub.s32 %v1642, %v1644
    %v1646 = vrot.slane %v1638, %v1645
    %v1648 = vunpack.c.l.s4 1983009808
    %v1649 = vunpack.c.0.s8 %v1648
    %v1650 = vlaneseq
    %v1651 = vshrl.u32 %v1650, 7
    %v1652 = vsub.s32 %v1649, %v1651
    %v1653 = vrot.slane %v1639, %v1652
    %v1654 = vcombine.low %v1598, %v1614
    %v1655 = vcombine.high %v1598, %v1614
    %v1657 = vunpack.c.l.s4 1934713408
    %v1658 = vunpack.c.0.s8 %v1657
    %v1659 = vlaneseq
    %v1660 = vshrl.u32 %v1659, 7
    %v1661 = vsub.s32 %v1658, %v1660
    %v1662 = vrot.slane %v1654, %v1661
    %v1664 = vunpack.c.l.s4 1934713408
    %v1665 = vunpack.c.0.s8 %v1664
    %v1666 = vlaneseq
    %v1667 = vshrl.u32 %v1666, 7
    %v1668 = vsub.s32 %v1665, %v1667
    %v1669 = vrot.slane %v1655, %v1668
    %v1670 = vcombine.low %v1605, %v1621
    %v1671 = vcombine.high %v1605, %v1621
    %v1673 = vunpack.c.l.s4 1934713408
    %v1674 = vunpack.c.0.s8 %v1673
    %v1675 = vlaneseq
    %v1676 = vshrl.u32 %v1675, 7
    %v1677 = vsub.s32 %v1674, %v1676
    %v1678 = vrot.slane %v1670, %v1677
    %v1680 = vunpack.c.l.s4 1934713408
    %v1681 = vunpack.c.0.s8 %v1680
    %v1682 = vlaneseq
    %v1683 = vshrl.u32 %v1682, 7
    %v1684 = vsub.s32 %v1681, %v1683
    %v1685 = vrot.slane %v1671, %v1684
    %v1686 = vcombine.low %v1630, %v1646
    %v1687 = vcombine.high %v1630, %v1646
    %v1689 = vunpack.c.l.s4 1934713408
    %v1690 = vunpack.c.0.s8 %v1689
    %v1691 = vlaneseq
    %v1692 = vshrl.u32 %v1691, 7
    %v1693 = vsub.s32 %v1690, %v1692
    %v1694 = vrot.slane %v1686, %v1693
    %v1696 = vunpack.c.l.s4 1934713408
    %v1697 = vunpack.c.0.s8 %v1696
    %v1698 = vlaneseq
    %v1699 = vshrl.u32 %v1698, 7
    %v1700 = vsub.s32 %v1697, %v1699
    %v1701 = vrot.slane %v1687, %v1700
    %v1702 = vcombine.low %v1637, %v1653
    %v1703 = vcombine.high %v1637, %v1653
    %v1705 = vunpack.c.l.s4 1934713408
    %v1706 = vunpack.c.0.s8 %v1705
    %v1707 = vlaneseq
    %v1708 = vshrl.u32 %v1707, 7
    %v1709 = vsub.s32 %v1706, %v1708
    %v1710 = vrot.slane %v1702, %v1709
    %v1712 = vunpack.c.l.s4 1934713408
    %v1713 = vunpack.c.0.s8 %v1712
    %v1714 = vlaneseq
    %v1715 = vshrl.u32 %v1714, 7
    %v1716 = vsub.s32 %v1713, %v1715
    %v1717 = vrot.slane %v1703, %v1716
    %v1718 = vcombine.low %v1662, %v1694
    %v1719 = vcombine.high %v1662, %v1694
    %v1720 = vcombine.low %v1669, %v1701
    %v1721 = vcombine.high %v1669, %v1701
    %v1722 = vcombine.low %v1678, %v1710
    %v1723 = vcombine.high %v1678, %v1710
    %v1724 = vcombine.low %v1685, %v1717
    %v1725 = vcombine.high %v1685, %v1717
    %v1726 = vcombine.low %v838, %v902
    %v1727 = vcombine.high %v838, %v902
    %v1729 = vunpack.c.l.s4 1983009808
    %v1730 = vunpack.c.0.s8 %v1729
    %v1731 = vlaneseq
    %v1732 = vshrl.u32 %v1731, 7
    %v1733 = vsub.s32 %v1730, %v1732
    %v1734 = vrot.slane %v1726, %v1733
    %v1736 = vunpack.c.l.s4 1983009808
    %v1737 = vunpack.c.0.s8 %v1736
    %v1738 = vlaneseq
    %v1739 = vshrl.u32 %v1738, 7
    %v1740 = vsub.s32 %v1737, %v1739
    %v1741 = vrot.slane %v1727, %v1740
    %v1742 = vcombine.low %v870, %v934
    %v1743 = vcombine.high %v870, %v934
    %v1745 = vunpack.c.l.s4 1983009808
    %v1746 = vunpack.c.0.s8 %v1745
    %v1747 = vlaneseq
    %v1748 = vshrl.u32 %v1747, 7
    %v1749 = vsub.s32 %v1746, %v1748
    %v1750 = vrot.slane %v1742, %v1749
    %v1752 = vunpack.c.l.s4 1983009808
    %v1753 = vunpack.c.0.s8 %v1752
    %v1754 = vlaneseq
    %v1755 = vshrl.u32 %v1754, 7
    %v1756 = vsub.s32 %v1753, %v1755
    %v1757 = vrot.slane %v1743, %v1756
    %v1758 = vcombine.low %v966, %v1030
    %v1759 = vcombine.high %v966, %v1030
    %v1761 = vunpack.c.l.s4 1983009808
    %v1762 = vunpack.c.0.s8 %v1761
    %v1763 = vlaneseq
    %v1764 = vshrl.u32 %v1763, 7
    %v1765 = vsub.s32 %v1762, %v1764
    %v1766 = vrot.slane %v1758, %v1765
    %v1768 = vunpack.c.l.s4 1983009808
    %v1769 = vunpack.c.0.s8 %v1768
    %v1770 = vlaneseq
    %v1771 = vshrl.u32 %v1770, 7
    %v1772 = vsub.s32 %v1769, %v1771
    %v1773 = vrot.slane %v1759, %v1772
    %v1774 = vcombine.low %v998, %v1062
    %v1775 = vcombine.high %v998, %v1062
    %v1777 = vunpack.c.l.s4 1983009808
    %v1778 = vunpack.c.0.s8 %v1777
    %v1779 = vlaneseq
    %v1780 = vshrl.u32 %v1779, 7
    %v1781 = vsub.s32 %v1778, %v1780
    %v1782 = vrot.slane %v1774, %v1781
    %v1784 = vunpack.c.l.s4 1983009808
    %v1785 = vunpack.c.0.s8 %v1784
    %v1786 = vlaneseq
    %v1787 = vshrl.u32 %v1786, 7
    %v1788 = vsub.s32 %v1785, %v1787
    %v1789 = vrot.slane %v1775, %v1788
    %v1790 = vcombine.low %v1734, %v1750
    %v1791 = vcombine.high %v1734, %v1750
    %v1793 = vunpack.c.l.s4 1934713408
    %v1794 = vunpack.c.0.s8 %v1793
    %v1795 = vlaneseq
    %v1796 = vshrl.u32 %v1795, 7
    %v1797 = vsub.s32 %v1794, %v1796
    %v1798 = vrot.slane %v1790, %v1797
    %v1800 = vunpack.c.l.s4 1934713408
    %v1801 = vunpack.c.0.s8 %v1800
    %v1802 = vlaneseq
    %v1803 = vshrl.u32 %v1802, 7
    %v1804 = vsub.s32 %v1801, %v1803
    %v1805 = vrot.slane %v1791, %v1804
    %v1806 = vcombine.low %v1741, %v1757
    %v1807 = vcombine.high %v1741, %v1757
    %v1809 = vunpack.c.l.s4 1934713408
    %v1810 = vunpack.c.0.s8 %v1809
    %v1811 = vlaneseq
    %v1812 = vshrl.u32 %v1811, 7
    %v1813 = vsub.s32 %v1810, %v1812
    %v1814 = vrot.slane %v1806, %v1813
    %v1816 = vunpack.c.l.s4 1934713408
    %v1817 = vunpack.c.0.s8 %v1816
    %v1818 = vlaneseq
    %v1819 = vshrl.u32 %v1818, 7
    %v1820 = vsub.s32 %v1817, %v1819
    %v1821 = vrot.slane %v1807, %v1820
    %v1822 = vcombine.low %v1766, %v1782
    %v1823 = vcombine.high %v1766, %v1782
    %v1825 = vunpack.c.l.s4 1934713408
    %v1826 = vunpack.c.0.s8 %v1825
    %v1827 = vlaneseq
    %v1828 = vshrl.u32 %v1827, 7
    %v1829 = vsub.s32 %v1826, %v1828
    %v1830 = vrot.slane %v1822, %v1829
    %v1832 = vunpack.c.l.s4 1934713408
    %v1833 = vunpack.c.0.s8 %v1832
    %v1834 = vlaneseq
    %v1835 = vshrl.u32 %v1834, 7
    %v1836 = vsub.s32 %v1833, %v1835
    %v1837 = vrot.slane %v1823, %v1836
    %v1838 = vcombine.low %v1773, %v1789
    %v1839 = vcombine.high %v1773, %v1789
    %v1841 = vunpack.c.l.s4 1934713408
    %v1842 = vunpack.c.0.s8 %v1841
    %v1843 = vlaneseq
    %v1844 = vshrl.u32 %v1843, 7
    %v1845 = vsub.s32 %v1842, %v1844
    %v1846 = vrot.slane %v1838, %v1845
    %v1848 = vunpack.c.l.s4 1934713408
    %v1849 = vunpack.c.0.s8 %v1848
    %v1850 = vlaneseq
    %v1851 = vshrl.u32 %v1850, 7
    %v1852 = vsub.s32 %v1849, %v1851
    %v1853 = vrot.slane %v1839, %v1852
    %v1854 = vcombine.low %v1798, %v1830
    %v1855 = vcombine.high %v1798, %v1830
    %v1856 = vcombine.low %v1805, %v1837
    %v1857 = vcombine.high %v1805, %v1837
    %v1858 = vcombine.low %v1814, %v1846
    %v1859 = vcombine.high %v1814, %v1846
    %v1860 = vcombine.low %v1821, %v1853
    %v1861 = vcombine.high %v1821, %v1853
    %v1862 = vcombine.low %v583, %v647
    %v1863 = vcombine.high %v583, %v647
    %v1865 = vunpack.c.l.s4 1983009808
    %v1866 = vunpack.c.0.s8 %v1865
    %v1867 = vlaneseq
    %v1868 = vshrl.u32 %v1867, 7
    %v1869 = vsub.s32 %v1866, %v1868
    %v1870 = vrot.slane %v1862, %v1869
    %v1872 = vunpack.c.l.s4 1983009808
    %v1873 = vunpack.c.0.s8 %v1872
    %v1874 = vlaneseq
    %v1875 = vshrl.u32 %v1874, 7
    %v1876 = vsub.s32 %v1873, %v1875
    %v1877 = vrot.slane %v1863, %v1876
    %v1878 = vcombine.low %v615, %v679
    %v1879 = vcombine.high %v615, %v679
    %v1881 = vunpack.c.l.s4 1983009808
    %v1882 = vunpack.c.0.s8 %v1881
    %v1883 = vlaneseq
    %v1884 = vshrl.u32 %v1883, 7
    %v1885 = vsub.s32 %v1882, %v1884
    %v1886 = vrot.slane %v1878, %v1885
    %v1888 = vunpack.c.l.s4 1983009808
    %v1889 = vunpack.c.0.s8 %v1888
    %v1890 = vlaneseq
    %v1891 = vshrl.u32 %v1890, 7
    %v1892 = vsub.s32 %v1889, %v1891
    %v1893 = vrot.slane %v1879, %v1892
    %v1894 = vcombine.low %v711, %v775
    %v1895 = vcombine.high %v711, %v775
    %v1897 = vunpack.c.l.s4 1983009808
    %v1898 = vunpack.c.0.s8 %v1897
    %v1899 = vlaneseq
    %v1900 = vshrl.u32 %v1899, 7
    %v1901 = vsub.s32 %v1898, %v1900
    %v1902 = vrot.slane %v1894, %v1901
    %v1904 = vunpack.c.l.s4 1983009808
    %v1905 = vunpack.c.0.s8 %v1904
    %v1906 = vlaneseq
    %v1907 = vshrl.u32 %v1906, 7
    %v1908 = vsub.s32 %v1905, %v1907
    %v1909 = vrot.slane %v1895, %v1908
    %v1910 = vcombine.low %v743, %v807
    %v1911 = vcombine.high %v743, %v807
    %v1913 = vunpack.c.l.s4 1983009808
    %v1914 = vunpack.c.0.s8 %v1913
    %v1915 = vlaneseq
    %v1916 = vshrl.u32 %v1915, 7
    %v1917 = vsub.s32 %v1914, %v1916
    %v1918 = vrot.slane %v1910, %v1917
    %v1920 = vunpack.c.l.s4 1983009808
    %v1921 = vunpack.c.0.s8 %v1920
    %v1922 = vlaneseq
    %v1923 = vshrl.u32 %v1922, 7
    %v1924 = vsub.s32 %v1921, %v1923
    %v1925 = vrot.slane %v1911, %v1924
    %v1926 = vcombine.low %v1870, %v1886
    %v1927 = vcombine.high %v1870, %v1886
    %v1929 = vunpack.c.l.s4 1934713408
    %v1930 = vunpack.c.0.s8 %v1929
    %v1931 = vlaneseq
    %v1932 = vshrl.u32 %v1931, 7
    %v1933 = vsub.s32 %v1930, %v1932
    %v1934 = vrot.slane %v1926, %v1933
    %v1936 = vunpack.c.l.s4 1934713408
    %v1937 = vunpack.c.0.s8 %v1936
    %v1938 = vlaneseq
    %v1939 = vshrl.u32 %v1938, 7
    %v1940 = vsub.s32 %v1937, %v1939
    %v1941 = vrot.slane %v1927, %v1940
    %v1942 = vcombine.low %v1877, %v1893
    %v1943 = vcombine.high %v1877, %v1893
    %v1945 = vunpack.c.l.s4 1934713408
    %v1946 = vunpack.c.0.s8 %v1945
    %v1947 = vlaneseq
    %v1948 = vshrl.u32 %v1947, 7
    %v1949 = vsub.s32 %v1946, %v1948
    %v1950 = vrot.slane %v1942, %v1949
    %v1952 = vunpack.c.l.s4 1934713408
    %v1953 = vunpack.c.0.s8 %v1952
    %v1954 = vlaneseq
    %v1955 = vshrl.u32 %v1954, 7
    %v1956 = vsub.s32 %v1953, %v1955
    %v1957 = vrot.slane %v1943, %v1956
    %v1958 = vcombine.low %v1902, %v1918
    %v1959 = vcombine.high %v1902, %v1918
    %v1961 = vunpack.c.l.s4 1934713408
    %v1962 = vunpack.c.0.s8 %v1961
    %v1963 = vlaneseq
    %v1964 = vshrl.u32 %v1963, 7
    %v1965 = vsub.s32 %v1962, %v1964
    %v1966 = vrot.slane %v1958, %v1965
    %v1968 = vunpack.c.l.s4 1934713408
    %v1969 = vunpack.c.0.s8 %v1968
    %v1970 = vlaneseq
    %v1971 = vshrl.u32 %v1970, 7
    %v1972 = vsub.s32 %v1969, %v1971
    %v1973 = vrot.slane %v1959, %v1972
    %v1974 = vcombine.low %v1909, %v1925
    %v1975 = vcombine.high %v1909, %v1925
    %v1977 = vunpack.c.l.s4 1934713408
    %v1978 = vunpack.c.0.s8 %v1977
    %v1979 = vlaneseq
    %v1980 = vshrl.u32 %v1979, 7
    %v1981 = vsub.s32 %v1978, %v1980
    %v1982 = vrot.slane %v1974, %v1981
    %v1984 = vunpack.c.l.s4 1934713408
    %v1985 = vunpack.c.0.s8 %v1984
    %v1986 = vlaneseq
    %v1987 = vshrl.u32 %v1986, 7
    %v1988 = vsub.s32 %v1985, %v1987
    %v1989 = vrot.slane %v1975, %v1988
    %v1990 = vcombine.low %v1934, %v1966
    %v1991 = vcombine.high %v1934, %v1966
    %v1992 = vcombine.low %v1941, %v1973
    %v1993 = vcombine.high %v1941, %v1973
    %v1994 = vcombine.low %v1950, %v1982
    %v1995 = vcombine.high %v1950, %v1982
    %v1996 = vcombine.low %v1957, %v1989
    %v1997 = vcombine.high %v1957, %v1989
    %v1998 = vcombine.low %v839, %v903
    %v1999 = vcombine.high %v839, %v903
    %v2001 = vunpack.c.l.s4 1983009808
    %v2002 = vunpack.c.0.s8 %v2001
    %v2003 = vlaneseq
    %v2004 = vshrl.u32 %v2003, 7
    %v2005 = vsub.s32 %v2002, %v2004
    %v2006 = vrot.slane %v1998, %v2005
    %v2008 = vunpack.c.l.s4 1983009808
    %v2009 = vunpack.c.0.s8 %v2008
    %v2010 = vlaneseq
    %v2011 = vshrl.u32 %v2010, 7
    %v2012 = vsub.s32 %v2009, %v2011
    %v2013 = vrot.slane %v1999, %v2012
    %v2014 = vcombine.low %v871, %v935
    %v2015 = vcombine.high %v871, %v935
    %v2017 = vunpack.c.l.s4 1983009808
    %v2018 = vunpack.c.0.s8 %v2017
    %v2019 = vlaneseq
    %v2020 = vshrl.u32 %v2019, 7
    %v2021 = vsub.s32 %v2018, %v2020
    %v2022 = vrot.slane %v2014, %v2021
    %v2024 = vunpack.c.l.s4 1983009808
    %v2025 = vunpack.c.0.s8 %v2024
    %v2026 = vlaneseq
    %v2027 = vshrl.u32 %v2026, 7
    %v2028 = vsub.s32 %v2025, %v2027
    %v2029 = vrot.slane %v2015, %v2028
    %v2030 = vcombine.low %v967, %v1031
    %v2031 = vcombine.high %v967, %v1031
    %v2033 = vunpack.c.l.s4 1983009808
    %v2034 = vunpack.c.0.s8 %v2033
    %v2035 = vlaneseq
    %v2036 = vshrl.u32 %v2035, 7
    %v2037 = vsub.s32 %v2034, %v2036
    %v2038 = vrot.slane %v2030, %v2037
    %v2040 = vunpack.c.l.s4 1983009808
    %v2041 = vunpack.c.0.s8 %v2040
    %v2042 = vlaneseq
    %v2043 = vshrl.u32 %v2042, 7
    %v2044 = vsub.s32 %v2041, %v2043
    %v2045 = vrot.slane %v2031, %v2044
    %v2046 = vcombine.low %v999, %v1063
    %v2047 = vcombine.high %v999, %v1063
    %v2049 = vunpack.c.l.s4 1983009808
    %v2050 = vunpack.c.0.s8 %v2049
    %v2051 = vlaneseq
    %v2052 = vshrl.u32 %v2051, 7
    %v2053 = vsub.s32 %v2050, %v2052
    %v2054 = vrot.slane %v2046, %v2053
    %v2056 = vunpack.c.l.s4 1983009808
    %v2057 = vunpack.c.0.s8 %v2056
    %v2058 = vlaneseq
    %v2059 = vshrl.u32 %v2058, 7
    %v2060 = vsub.s32 %v2057, %v2059
    %v2061 = vrot.slane %v2047, %v2060
    %v2062 = vcombine.low %v2006, %v2022
    %v2063 = vcombine.high %v2006, %v2022
    %v2065 = vunpack.c.l.s4 1934713408
    %v2066 = vunpack.c.0.s8 %v2065
    %v2067 = vlaneseq
    %v2068 = vshrl.u32 %v2067, 7
    %v2069 = vsub.s32 %v2066, %v2068
    %v2070 = vrot.slane %v2062, %v2069
    %v2072 = vunpack.c.l.s4 1934713408
    %v2073 = vunpack.c.0.s8 %v2072
    %v2074 = vlaneseq
    %v2075 = vshrl.u32 %v2074, 7
    %v2076 = vsub.s32 %v2073, %v2075
    %v2077 = vrot.slane %v2063, %v2076
    %v2078 = vcombine.low %v2013, %v2029
    %v2079 = vcombine.high %v2013, %v2029
    %v2081 = vunpack.c.l.s4 1934713408
    %v2082 = vunpack.c.0.s8 %v2081
    %v2083 = vlaneseq
    %v2084 = vshrl.u32 %v2083, 7
    %v2085 = vsub.s32 %v2082, %v2084
    %v2086 = vrot.slane %v2078, %v2085
    %v2088 = vunpack.c.l.s4 1934713408
    %v2089 = vunpack.c.0.s8 %v2088
    %v2090 = vlaneseq
    %v2091 = vshrl.u32 %v2090, 7
    %v2092 = vsub.s32 %v2089, %v2091
    %v2093 = vrot.slane %v2079, %v2092
    %v2094 = vcombine.low %v2038, %v2054
    %v2095 = vcombine.high %v2038, %v2054
    %v2097 = vunpack.c.l.s4 1934713408
    %v2098 = vunpack.c.0.s8 %v2097
    %v2099 = vlaneseq
    %v2100 = vshrl.u32 %v2099, 7
    %v2101 = vsub.s32 %v2098, %v2100
    %v2102 = vrot.slane %v2094, %v2101
    %v2104 = vunpack.c.l.s4 1934713408
    %v2105 = vunpack.c.0.s8 %v2104
    %v2106 = vlaneseq
    %v2107 = vshrl.u32 %v2106, 7
    %v2108 = vsub.s32 %v2105, %v2107
    %v2109 = vrot.slane %v2095, %v2108
    %v2110 = vcombine.low %v2045, %v2061
    %v2111 = vcombine.high %v2045, %v2061
    %v2113 = vunpack.c.l.s4 1934713408
    %v2114 = vunpack.c.0.s8 %v2113
    %v2115 = vlaneseq
    %v2116 = vshrl.u32 %v2115, 7
    %v2117 = vsub.s32 %v2114, %v2116
    %v2118 = vrot.slane %v2110, %v2117
    %v2120 = vunpack.c.l.s4 1934713408
    %v2121 = vunpack.c.0.s8 %v2120
    %v2122 = vlaneseq
    %v2123 = vshrl.u32 %v2122, 7
    %v2124 = vsub.s32 %v2121, %v2123
    %v2125 = vrot.slane %v2111, %v2124
    %v2126 = vcombine.low %v2070, %v2102
    %v2127 = vcombine.high %v2070, %v2102
    %v2128 = vcombine.low %v2077, %v2109
    %v2129 = vcombine.high %v2077, %v2109
    %v2130 = vcombine.low %v2086, %v2118
    %v2131 = vcombine.high %v2086, %v2118
    %v2132 = vcombine.low %v2093, %v2125
    %v2133 = vcombine.high %v2093, %v2125
    %v2134 = vcombine.low %v1094, %v1158
    %v2135 = vcombine.high %v1094, %v1158
    %v2137 = vunpack.c.l.s4 1983009808
    %v2138 = vunpack.c.0.s8 %v2137
    %v2139 = vlaneseq
    %v2140 = vshrl.u32 %v2139, 7
    %v2141 = vsub.s32 %v2138, %v2140
    %v2142 = vrot.slane %v2134, %v2141
    %v2144 = vunpack.c.l.s4 1983009808
    %v2145 = vunpack.c.0.s8 %v2144
    %v2146 = vlaneseq
    %v2147 = vshrl.u32 %v2146, 7
    %v2148 = vsub.s32 %v2145, %v2147
    %v2149 = vrot.slane %v2135, %v2148
    %v2150 = vcombine.low %v1126, %v1190
    %v2151 = vcombine.high %v1126, %v1190
    %v2153 = vunpack.c.l.s4 1983009808
    %v2154 = vunpack.c.0.s8 %v2153
    %v2155 = vlaneseq
    %v2156 = vshrl.u32 %v2155, 7
    %v2157 = vsub.s32 %v2154, %v2156
    %v2158 = vrot.slane %v2150, %v2157
    %v2160 = vunpack.c.l.s4 1983009808
    %v2161 = vunpack.c.0.s8 %v2160
    %v2162 = vlaneseq
    %v2163 = vshrl.u32 %v2162, 7
    %v2164 = vsub.s32 %v2161, %v2163
    %v2165 = vrot.slane %v2151, %v2164
    %v2166 = vcombine.low %v1222, %v1286
    %v2167 = vcombine.high %v1222, %v1286
    %v2169 = vunpack.c.l.s4 1983009808
    %v2170 = vunpack.c.0.s8 %v2169
    %v2171 = vlaneseq
    %v2172 = vshrl.u32 %v2171, 7
    %v2173 = vsub.s32 %v2170, %v2172
    %v2174 = vrot.slane %v2166, %v2173
    %v2176 = vunpack.c.l.s4 1983009808
    %v2177 = vunpack.c.0.s8 %v2176
    %v2178 = vlaneseq
    %v2179 = vshrl.u32 %v2178, 7
    %v2180 = vsub.s32 %v2177, %v2179
    %v2181 = vrot.slane %v2167, %v2180
    %v2182 = vcombine.low %v1254, %v1318
    %v2183 = vcombine.high %v1254, %v1318
    %v2185 = vunpack.c.l.s4 1983009808
    %v2186 = vunpack.c.0.s8 %v2185
    %v2187 = vlaneseq
    %v2188 = vshrl.u32 %v2187, 7
    %v2189 = vsub.s32 %v2186, %v2188
    %v2190 = vrot.slane %v2182, %v2189
    %v2192 = vunpack.c.l.s4 1983009808
    %v2193 = vunpack.c.0.s8 %v2192
    %v2194 = vlaneseq
    %v2195 = vshrl.u32 %v2194, 7
    %v2196 = vsub.s32 %v2193, %v2195
    %v2197 = vrot.slane %v2183, %v2196
    %v2198 = vcombine.low %v2142, %v2158
    %v2199 = vcombine.high %v2142, %v2158
    %v2201 = vunpack.c.l.s4 1934713408
    %v2202 = vunpack.c.0.s8 %v2201
    %v2203 = vlaneseq
    %v2204 = vshrl.u32 %v2203, 7
    %v2205 = vsub.s32 %v2202, %v2204
    %v2206 = vrot.slane %v2198, %v2205
    %v2208 = vunpack.c.l.s4 1934713408
    %v2209 = vunpack.c.0.s8 %v2208
    %v2210 = vlaneseq
    %v2211 = vshrl.u32 %v2210, 7
    %v2212 = vsub.s32 %v2209, %v2211
    %v2213 = vrot.slane %v2199, %v2212
    %v2214 = vcombine.low %v2149, %v2165
    %v2215 = vcombine.high %v2149, %v2165
    %v2217 = vunpack.c.l.s4 1934713408
    %v2218 = vunpack.c.0.s8 %v2217
    %v2219 = vlaneseq
    %v2220 = vshrl.u32 %v2219, 7
    %v2221 = vsub.s32 %v2218, %v2220
    %v2222 = vrot.slane %v2214, %v2221
    %v2224 = vunpack.c.l.s4 1934713408
    %v2225 = vunpack.c.0.s8 %v2224
    %v2226 = vlaneseq
    %v2227 = vshrl.u32 %v2226, 7
    %v2228 = vsub.s32 %v2225, %v2227
    %v2229 = vrot.slane %v2215, %v2228
    %v2230 = vcombine.low %v2174, %v2190
    %v2231 = vcombine.high %v2174, %v2190
    %v2233 = vunpack.c.l.s4 1934713408
    %v2234 = vunpack.c.0.s8 %v2233
    %v2235 = vlaneseq
    %v2236 = vshrl.u32 %v2235, 7
    %v2237 = vsub.s32 %v2234, %v2236
    %v2238 = vrot.slane %v2230, %v2237
    %v2240 = vunpack.c.l.s4 1934713408
    %v2241 = vunpack.c.0.s8 %v2240
    %v2242 = vlaneseq
    %v2243 = vshrl.u32 %v2242, 7
    %v2244 = vsub.s32 %v2241, %v2243
    %v2245 = vrot.slane %v2231, %v2244
    %v2246 = vcombine.low %v2181, %v2197
    %v2247 = vcombine.high %v2181, %v2197
    %v2249 = vunpack.c.l.s4 1934713408
    %v2250 = vunpack.c.0.s8 %v2249
    %v2251 = vlaneseq
    %v2252 = vshrl.u32 %v2251, 7
    %v2253 = vsub.s32 %v2250, %v2252
    %v2254 = vrot.slane %v2246, %v2253
    %v2256 = vunpack.c.l.s4 1934713408
    %v2257 = vunpack.c.0.s8 %v2256
    %v2258 = vlaneseq
    %v2259 = vshrl.u32 %v2258, 7
    %v2260 = vsub.s32 %v2257, %v2259
    %v2261 = vrot.slane %v2247, %v2260
    %v2262 = vcombine.low %v2206, %v2238
    %v2263 = vcombine.high %v2206, %v2238
    %v2264 = vcombine.low %v2213, %v2245
    %v2265 = vcombine.high %v2213, %v2245
    %v2266 = vcombine.low %v2222, %v2254
    %v2267 = vcombine.high %v2222, %v2254
    %v2268 = vcombine.low %v2229, %v2261
    %v2269 = vcombine.high %v2229, %v2261
    %v2270 = vcombine.low %v1350, %v1414
    %v2271 = vcombine.high %v1350, %v1414
    %v2273 = vunpack.c.l.s4 1983009808
    %v2274 = vunpack.c.0.s8 %v2273
    %v2275 = vlaneseq
    %v2276 = vshrl.u32 %v2275, 7
    %v2277 = vsub.s32 %v2274, %v2276
    %v2278 = vrot.slane %v2270, %v2277
    %v2280 = vunpack.c.l.s4 1983009808
    %v2281 = vunpack.c.0.s8 %v2280
    %v2282 = vlaneseq
    %v2283 = vshrl.u32 %v2282, 7
    %v2284 = vsub.s32 %v2281, %v2283
    %v2285 = vrot.slane %v2271, %v2284
    %v2286 = vcombine.low %v1382, %v1446
    %v2287 = vcombine.high %v1382, %v1446
    %v2289 = vunpack.c.l.s4 1983009808
    %v2290 = vunpack.c.0.s8 %v2289
    %v2291 = vlaneseq
    %v2292 = vshrl.u32 %v2291, 7
    %v2293 = vsub.s32 %v2290, %v2292
    %v2294 = vrot.slane %v2286, %v2293
    %v2296 = vunpack.c.l.s4 1983009808
    %v2297 = vunpack.c.0.s8 %v2296
    %v2298 = vlaneseq
    %v2299 = vshrl.u32 %v2298, 7
    %v2300 = vsub.s32 %v2297, %v2299
    %v2301 = vrot.slane %v2287, %v2300
    %v2302 = vcombine.low %v1478, %v1542
    %v2303 = vcombine.high %v1478, %v1542
    %v2305 = vunpack.c.l.s4 1983009808
    %v2306 = vunpack.c.0.s8 %v2305
    %v2307 = vlaneseq
    %v2308 = vshrl.u32 %v2307, 7
    %v2309 = vsub.s32 %v2306, %v2308
    %v2310 = vrot.slane %v2302, %v2309
    %v2312 = vunpack.c.l.s4 1983009808
    %v2313 = vunpack.c.0.s8 %v2312
    %v2314 = vlaneseq
    %v2315 = vshrl.u32 %v2314, 7
    %v2316 = vsub.s32 %v2313, %v2315
    %v2317 = vrot.slane %v2303, %v2316
    %v2318 = vcombine.low %v1510, %v1574
    %v2319 = vcombine.high %v1510, %v1574
    %v2321 = vunpack.c.l.s4 1983009808
    %v2322 = vunpack.c.0.s8 %v2321
    %v2323 = vlaneseq
    %v2324 = vshrl.u32 %v2323, 7
    %v2325 = vsub.s32 %v2322, %v2324
    %v2326 = vrot.slane %v2318, %v2325
    %v2328 = vunpack.c.l.s4 1983009808
    %v2329 = vunpack.c.0.s8 %v2328
    %v2330 = vlaneseq
    %v2331 = vshrl.u32 %v2330, 7
    %v2332 = vsub.s32 %v2329, %v2331
    %v2333 = vrot.slane %v2319, %v2332
    %v2334 = vcombine.low %v2278, %v2294
    %v2335 = vcombine.high %v2278, %v2294
    %v2337 = vunpack.c.l.s4 1934713408
    %v2338 = vunpack.c.0.s8 %v2337
    %v2339 = vlaneseq
    %v2340 = vshrl.u32 %v2339, 7
    %v2341 = vsub.s32 %v2338, %v2340
    %v2342 = vrot.slane %v2334, %v2341
    %v2344 = vunpack.c.l.s4 1934713408
    %v2345 = vunpack.c.0.s8 %v2344
    %v2346 = vlaneseq
    %v2347 = vshrl.u32 %v2346, 7
    %v2348 = vsub.s32 %v2345, %v2347
    %v2349 = vrot.slane %v2335, %v2348
    %v2350 = vcombine.low %v2285, %v2301
    %v2351 = vcombine.high %v2285, %v2301
    %v2353 = vunpack.c.l.s4 1934713408
    %v2354 = vunpack.c.0.s8 %v2353
    %v2355 = vlaneseq
    %v2356 = vshrl.u32 %v2355, 7
    %v2357 = vsub.s32 %v2354, %v2356
    %v2358 = vrot.slane %v2350, %v2357
    %v2360 = vunpack.c.l.s4 1934713408
    %v2361 = vunpack.c.0.s8 %v2360
    %v2362 = vlaneseq
    %v2363 = vshrl.u32 %v2362, 7
    %v2364 = vsub.s32 %v2361, %v2363
    %v2365 = vrot.slane %v2351, %v2364
    %v2366 = vcombine.low %v2310, %v2326
    %v2367 = vcombine.high %v2310, %v2326
    %v2369 = vunpack.c.l.s4 1934713408
    %v2370 = vunpack.c.0.s8 %v2369
    %v2371 = vlaneseq
    %v2372 = vshrl.u32 %v2371, 7
    %v2373 = vsub.s32 %v2370, %v2372
    %v2374 = vrot.slane %v2366, %v2373
    %v2376 = vunpack.c.l.s4 1934713408
    %v2377 = vunpack.c.0.s8 %v2376
    %v2378 = vlaneseq
    %v2379 = vshrl.u32 %v2378, 7
    %v2380 = vsub.s32 %v2377, %v2379
    %v2381 = vrot.slane %v2367, %v2380
    %v2382 = vcombine.low %v2317, %v2333
    %v2383 = vcombine.high %v2317, %v2333
    %v2385 = vunpack.c.l.s4 1934713408
    %v2386 = vunpack.c.0.s8 %v2385
    %v2387 = vlaneseq
    %v2388 = vshrl.u32 %v2387, 7
    %v2389 = vsub.s32 %v2386, %v2388
    %v2390 = vrot.slane %v2382, %v2389
    %v2392 = vunpack.c.l.s4 1934713408
    %v2393 = vunpack.c.0.s8 %v2392
    %v2394 = vlaneseq
    %v2395 = vshrl.u32 %v2394, 7
    %v2396 = vsub.s32 %v2393, %v2395
    %v2397 = vrot.slane %v2383, %v2396
    %v2398 = vcombine.low %v2342, %v2374
    %v2399 = vcombine.high %v2342, %v2374
    %v2400 = vcombine.low %v2349, %v2381
    %v2401 = vcombine.high %v2349, %v2381
    %v2402 = vcombine.low %v2358, %v2390
    %v2403 = vcombine.high %v2358, %v2390
    %v2404 = vcombine.low %v2365, %v2397
    %v2405 = vcombine.high %v2365, %v2397
    %v2406 = vcombine.low %v1095, %v1159
    %v2407 = vcombine.high %v1095, %v1159
    %v2409 = vunpack.c.l.s4 1983009808
    %v2410 = vunpack.c.0.s8 %v2409
    %v2411 = vlaneseq
    %v2412 = vshrl.u32 %v2411, 7
    %v2413 = vsub.s32 %v2410, %v2412
    %v2414 = vrot.slane %v2406, %v2413
    %v2416 = vunpack.c.l.s4 1983009808
    %v2417 = vunpack.c.0.s8 %v2416
    %v2418 = vlaneseq
    %v2419 = vshrl.u32 %v2418, 7
    %v2420 = vsub.s32 %v2417, %v2419
    %v2421 = vrot.slane %v2407, %v2420
    %v2422 = vcombine.low %v1127, %v1191
    %v2423 = vcombine.high %v1127, %v1191
    %v2425 = vunpack.c.l.s4 1983009808
    %v2426 = vunpack.c.0.s8 %v2425
    %v2427 = vlaneseq
    %v2428 = vshrl.u32 %v2427, 7
    %v2429 = vsub.s32 %v2426, %v2428
    %v2430 = vrot.slane %v2422, %v2429
    %v2432 = vunpack.c.l.s4 1983009808
    %v2433 = vunpack.c.0.s8 %v2432
    %v2434 = vlaneseq
    %v2435 = vshrl.u32 %v2434, 7
    %v2436 = vsub.s32 %v2433, %v2435
    %v2437 = vrot.slane %v2423, %v2436
    %v2438 = vcombine.low %v1223, %v1287
    %v2439 = vcombine.high %v1223, %v1287
    %v2441 = vunpack.c.l.s4 1983009808
    %v2442 = vunpack.c.0.s8 %v2441
    %v2443 = vlaneseq
    %v2444 = vshrl.u32 %v2443, 7
    %v2445 = vsub.s32 %v2442, %v2444
    %v2446 = vrot.slane %v2438, %v2445
    %v2448 = vunpack.c.l.s4 1983009808
    %v2449 = vunpack.c.0.s8 %v2448
    %v2450 = vlaneseq
    %v2451 = vshrl.u32 %v2450, 7
    %v2452 = vsub.s32 %v2449, %v2451
    %v2453 = vrot.slane %v2439, %v2452
    %v2454 = vcombine.low %v1255, %v1319
    %v2455 = vcombine.high %v1255, %v1319
    %v2457 = vunpack.c.l.s4 1983009808
    %v2458 = vunpack.c.0.s8 %v2457
    %v2459 = vlaneseq
    %v2460 = vshrl.u32 %v2459, 7
    %v2461 = vsub.s32 %v2458, %v2460
    %v2462 = vrot.slane %v2454, %v2461
    %v2464 = vunpack.c.l.s4 1983009808
    %v2465 = vunpack.c.0.s8 %v2464
    %v2466 = vlaneseq
    %v2467 = vshrl.u32 %v2466, 7
    %v2468 = vsub.s32 %v2465, %v2467
    %v2469 = vrot.slane %v2455, %v2468
    %v2470 = vcombine.low %v2414, %v2430
    %v2471 = vcombine.high %v2414, %v2430
    %v2473 = vunpack.c.l.s4 1934713408
    %v2474 = vunpack.c.0.s8 %v2473
    %v2475 = vlaneseq
    %v2476 = vshrl.u32 %v2475, 7
    %v2477 = vsub.s32 %v2474, %v2476
    %v2478 = vrot.slane %v2470, %v2477
    %v2480 = vunpack.c.l.s4 1934713408
    %v2481 = vunpack.c.0.s8 %v2480
    %v2482 = vlaneseq
    %v2483 = vshrl.u32 %v2482, 7
    %v2484 = vsub.s32 %v2481, %v2483
    %v2485 = vrot.slane %v2471, %v2484
    %v2486 = vcombine.low %v2421, %v2437
    %v2487 = vcombine.high %v2421, %v2437
    %v2489 = vunpack.c.l.s4 1934713408
    %v2490 = vunpack.c.0.s8 %v2489
    %v2491 = vlaneseq
    %v2492 = vshrl.u32 %v2491, 7
    %v2493 = vsub.s32 %v2490, %v2492
    %v2494 = vrot.slane %v2486, %v2493
    %v2496 = vunpack.c.l.s4 1934713408
    %v2497 = vunpack.c.0.s8 %v2496
    %v2498 = vlaneseq
    %v2499 = vshrl.u32 %v2498, 7
    %v2500 = vsub.s32 %v2497, %v2499
    %v2501 = vrot.slane %v2487, %v2500
    %v2502 = vcombine.low %v2446, %v2462
    %v2503 = vcombine.high %v2446, %v2462
    %v2505 = vunpack.c.l.s4 1934713408
    %v2506 = vunpack.c.0.s8 %v2505
    %v2507 = vlaneseq
    %v2508 = vshrl.u32 %v2507, 7
    %v2509 = vsub.s32 %v2506, %v2508
    %v2510 = vrot.slane %v2502, %v2509
    %v2512 = vunpack.c.l.s4 1934713408
    %v2513 = vunpack.c.0.s8 %v2512
    %v2514 = vlaneseq
    %v2515 = vshrl.u32 %v2514, 7
    %v2516 = vsub.s32 %v2513, %v2515
    %v2517 = vrot.slane %v2503, %v2516
    %v2518 = vcombine.low %v2453, %v2469
    %v2519 = vcombine.high %v2453, %v2469
    %v2521 = vunpack.c.l.s4 1934713408
    %v2522 = vunpack.c.0.s8 %v2521
    %v2523 = vlaneseq
    %v2524 = vshrl.u32 %v2523, 7
    %v2525 = vsub.s32 %v2522, %v2524
    %v2526 = vrot.slane %v2518, %v2525
    %v2528 = vunpack.c.l.s4 1934713408
    %v2529 = vunpack.c.0.s8 %v2528
    %v2530 = vlaneseq
    %v2531 = vshrl.u32 %v2530, 7
    %v2532 = vsub.s32 %v2529, %v2531
    %v2533 = vrot.slane %v2519, %v2532
    %v2534 = vcombine.low %v2478, %v2510
    %v2535 = vcombine.high %v2478, %v2510
    %v2536 = vcombine.low %v2485, %v2517
    %v2537 = vcombine.high %v2485, %v2517
    %v2538 = vcombine.low %v2494, %v2526
    %v2539 = vcombine.high %v2494, %v2526
    %v2540 = vcombine.low %v2501, %v2533
    %v2541 = vcombine.high %v2501, %v2533
    %v2542 = vcombine.low %v1351, %v1415
    %v2543 = vcombine.high %v1351, %v1415
    %v2545 = vunpack.c.l.s4 1983009808
    %v2546 = vunpack.c.0.s8 %v2545
    %v2547 = vlaneseq
    %v2548 = vshrl.u32 %v2547, 7
    %v2549 = vsub.s32 %v2546, %v2548
    %v2550 = vrot.slane %v2542, %v2549
    %v2552 = vunpack.c.l.s4 1983009808
    %v2553 = vunpack.c.0.s8 %v2552
    %v2554 = vlaneseq
    %v2555 = vshrl.u32 %v2554, 7
    %v2556 = vsub.s32 %v2553, %v2555
    %v2557 = vrot.slane %v2543, %v2556
    %v2558 = vcombine.low %v1383, %v1447
    %v2559 = vcombine.high %v1383, %v1447
    %v2561 = vunpack.c.l.s4 1983009808
    %v2562 = vunpack.c.0.s8 %v2561
    %v2563 = vlaneseq
    %v2564 = vshrl.u32 %v2563, 7
    %v2565 = vsub.s32 %v2562, %v2564
    %v2566 = vrot.slane %v2558, %v2565
    %v2568 = vunpack.c.l.s4 1983009808
    %v2569 = vunpack.c.0.s8 %v2568
    %v2570 = vlaneseq
    %v2571 = vshrl.u32 %v2570, 7
    %v2572 = vsub.s32 %v2569, %v2571
    %v2573 = vrot.slane %v2559, %v2572
    %v2574 = vcombine.low %v1479, %v1543
    %v2575 = vcombine.high %v1479, %v1543
    %v2577 = vunpack.c.l.s4 1983009808
    %v2578 = vunpack.c.0.s8 %v2577
    %v2579 = vlaneseq
    %v2580 = vshrl.u32 %v2579, 7
    %v2581 = vsub.s32 %v2578, %v2580
    %v2582 = vrot.slane %v2574, %v2581
    %v2584 = vunpack.c.l.s4 1983009808
    %v2585 = vunpack.c.0.s8 %v2584
    %v2586 = vlaneseq
    %v2587 = vshrl.u32 %v2586, 7
    %v2588 = vsub.s32 %v2585, %v2587
    %v2589 = vrot.slane %v2575, %v2588
    %v2590 = vcombine.low %v1511, %v1575
    %v2591 = vcombine.high %v1511, %v1575
    %v2593 = vunpack.c.l.s4 1983009808
    %v2594 = vunpack.c.0.s8 %v2593
    %v2595 = vlaneseq
    %v2596 = vshrl.u32 %v2595, 7
    %v2597 = vsub.s32 %v2594, %v2596
    %v2598 = vrot.slane %v2590, %v2597
    %v2600 = vunpack.c.l.s4 1983009808
    %v2601 = vunpack.c.0.s8 %v2600
    %v2602 = vlaneseq
    %v2603 = vshrl.u32 %v2602, 7
    %v2604 = vsub.s32 %v2601, %v2603
    %v2605 = vrot.slane %v2591, %v2604
    %v2606 = vcombine.low %v2550, %v2566
    %v2607 = vcombine.high %v2550, %v2566
    %v2609 = vunpack.c.l.s4 1934713408
    %v2610 = vunpack.c.0.s8 %v2609
    %v2611 = vlaneseq
    %v2612 = vshrl.u32 %v2611, 7
    %v2613 = vsub.s32 %v2610, %v2612
    %v2614 = vrot.slane %v2606, %v2613
    %v2616 = vunpack.c.l.s4 1934713408
    %v2617 = vunpack.c.0.s8 %v2616
    %v2618 = vlaneseq
    %v2619 = vshrl.u32 %v2618, 7
    %v2620 = vsub.s32 %v2617, %v2619
    %v2621 = vrot.slane %v2607, %v2620
    %v2622 = vcombine.low %v2557, %v2573
    %v2623 = vcombine.high %v2557, %v2573
    %v2625 = vunpack.c.l.s4 1934713408
    %v2626 = vunpack.c.0.s8 %v2625
    %v2627 = vlaneseq
    %v2628 = vshrl.u32 %v2627, 7
    %v2629 = vsub.s32 %v2626, %v2628
    %v2630 = vrot.slane %v2622, %v2629
    %v2632 = vunpack.c.l.s4 1934713408
    %v2633 = vunpack.c.0.s8 %v2632
    %v2634 = vlaneseq
    %v2635 = vshrl.u32 %v2634, 7
    %v2636 = vsub.s32 %v2633, %v2635
    %v2637 = vrot.slane %v2623, %v2636
    %v2638 = vcombine.low %v2582, %v2598
    %v2639 = vcombine.high %v2582, %v2598
    %v2641 = vunpack.c.l.s4 1934713408
    %v2642 = vunpack.c.0.s8 %v2641
    %v2643 = vlaneseq
    %v2644 = vshrl.u32 %v2643, 7
    %v2645 = vsub.s32 %v2642, %v2644
    %v2646 = vrot.slane %v2638, %v2645
    %v2648 = vunpack.c.l.s4 1934713408
    %v2649 = vunpack.c.0.s8 %v2648
    %v2650 = vlaneseq
    %v2651 = vshrl.u32 %v2650, 7
    %v2652 = vsub.s32 %v2649, %v2651
    %v2653 = vrot.slane %v2639, %v2652
    %v2654 = vcombine.low %v2589, %v2605
    %v2655 = vcombine.high %v2589, %v2605
    %v2657 = vunpack.c.l.s4 1934713408
    %v2658 = vunpack.c.0.s8 %v2657
    %v2659 = vlaneseq
    %v2660 = vshrl.u32 %v2659, 7
    %v2661 = vsub.s32 %v2658, %v2660
    %v2662 = vrot.slane %v2654, %v2661
    %v2664 = vunpack.c.l.s4 1934713408
    %v2665 = vunpack.c.0.s8 %v2664
    %v2666 = vlaneseq
    %v2667 = vshrl.u32 %v2666, 7
    %v2668 = vsub.s32 %v2665, %v2667
    %v2669 = vrot.slane %v2655, %v2668
    %v2670 = vcombine.low %v2614, %v2646
    %v2671 = vcombine.high %v2614, %v2646
    %v2672 = vcombine.low %v2621, %v2653
    %v2673 = vcombine.high %v2621, %v2653
    %v2674 = vcombine.low %v2630, %v2662
    %v2675 = vcombine.high %v2630, %v2662
    %v2676 = vcombine.low %v2637, %v2669
    %v2677 = vcombine.high %v2637, %v2669
    %vm2678 = vcmask 31744
    %2679 = vst.msk [vmem:[%s1] sm:$0xff] %vm2678, %v1718
    %2680 = vst.msk [vmem:[%s1 + $0x8] sm:$0xff] %vm2678, %v1854
    %2681 = vst.msk [vmem:[%s1 + $0x10] sm:$0xff] %vm2678, %v1719
    %2682 = vst.msk [vmem:[%s1 + $0x18] sm:$0xff] %vm2678, %v1855
    %2683 = vst.msk [vmem:[%s1 + $0x20] sm:$0xff] %vm2678, %v1720
    %2684 = vst.msk [vmem:[%s1 + $0x28] sm:$0xff] %vm2678, %v1856
    %2685 = vst.msk [vmem:[%s1 + $0x30] sm:$0xff] %vm2678, %v1721
    %2686 = vst.msk [vmem:[%s1 + $0x38] sm:$0xff] %vm2678, %v1857
    %2687 = vst.msk [vmem:[%s1 + $0x40] sm:$0xff] %vm2678, %v1722
    %2688 = vst.msk [vmem:[%s1 + $0x48] sm:$0xff] %vm2678, %v1858
    %2689 = vst.msk [vmem:[%s1 + $0x50] sm:$0xff] %vm2678, %v1723
    %2690 = vst.msk [vmem:[%s1 + $0x58] sm:$0xff] %vm2678, %v1859
    %2691 = vst.msk [vmem:[%s1 + $0x60] sm:$0xff] %vm2678, %v1724
    %2692 = vst.msk [vmem:[%s1 + $0x68] sm:$0xff] %vm2678, %v1860
    %2693 = vst.msk [vmem:[%s1 + $0x70] sm:$0xff] %vm2678, %v1725
    %2694 = vst.msk [vmem:[%s1 + $0x78] sm:$0xff] %vm2678, %v1861
    %2695 = vst.msk [vmem:[%s1 + $0x80] sm:$0xff] %vm2678, %v1990
    %2696 = vst.msk [vmem:[%s1 + $0x88] sm:$0xff] %vm2678, %v2126
    %2697 = vst.msk [vmem:[%s1 + $0x90] sm:$0xff] %vm2678, %v1991
    %2698 = vst.msk [vmem:[%s1 + $0x98] sm:$0xff] %vm2678, %v2127
    %2699 = vst.msk [vmem:[%s1 + $0xa0] sm:$0xff] %vm2678, %v1992
    %2700 = vst.msk [vmem:[%s1 + $0xa8] sm:$0xff] %vm2678, %v2128
    %2701 = vst.msk [vmem:[%s1 + $0xb0] sm:$0xff] %vm2678, %v1993
    %2702 = vst.msk [vmem:[%s1 + $0xb8] sm:$0xff] %vm2678, %v2129
    %2703 = vst.msk [vmem:[%s1 + $0xc0] sm:$0xff] %vm2678, %v1994
    %2704 = vst.msk [vmem:[%s1 + $0xc8] sm:$0xff] %vm2678, %v2130
    %2705 = vst.msk [vmem:[%s1 + $0xd0] sm:$0xff] %vm2678, %v1995
    %2706 = vst.msk [vmem:[%s1 + $0xd8] sm:$0xff] %vm2678, %v2131
    %2707 = vst.msk [vmem:[%s1 + $0xe0] sm:$0xff] %vm2678, %v1996
    %2708 = vst.msk [vmem:[%s1 + $0xe8] sm:$0xff] %vm2678, %v2132
    %2709 = vst.msk [vmem:[%s1 + $0xf0] sm:$0xff] %vm2678, %v1997
    %2710 = vst.msk [vmem:[%s1 + $0xf8] sm:$0xff] %vm2678, %v2133
    %2711 = vst.msk [vmem:[%s1 + $0x100] sm:$0xff] %vm2678, %v2262
    %2712 = vst.msk [vmem:[%s1 + $0x108] sm:$0xff] %vm2678, %v2398
    %2713 = vst.msk [vmem:[%s1 + $0x110] sm:$0xff] %vm2678, %v2263
    %2714 = vst.msk [vmem:[%s1 + $0x118] sm:$0xff] %vm2678, %v2399
    %2715 = vst.msk [vmem:[%s1 + $0x120] sm:$0xff] %vm2678, %v2264
    %2716 = vst.msk [vmem:[%s1 + $0x128] sm:$0xff] %vm2678, %v2400
    %2717 = vst.msk [vmem:[%s1 + $0x130] sm:$0xff] %vm2678, %v2265
    %2718 = vst.msk [vmem:[%s1 + $0x138] sm:$0xff] %vm2678, %v2401
    %2719 = vst.msk [vmem:[%s1 + $0x140] sm:$0xff] %vm2678, %v2266
    %2720 = vst.msk [vmem:[%s1 + $0x148] sm:$0xff] %vm2678, %v2402
    %2721 = vst.msk [vmem:[%s1 + $0x150] sm:$0xff] %vm2678, %v2267
    %2722 = vst.msk [vmem:[%s1 + $0x158] sm:$0xff] %vm2678, %v2403
    %2723 = vst.msk [vmem:[%s1 + $0x160] sm:$0xff] %vm2678, %v2268
    %2724 = vst.msk [vmem:[%s1 + $0x168] sm:$0xff] %vm2678, %v2404
    %2725 = vst.msk [vmem:[%s1 + $0x170] sm:$0xff] %vm2678, %v2269
    %2726 = vst.msk [vmem:[%s1 + $0x178] sm:$0xff] %vm2678, %v2405
    %2727 = vst.msk [vmem:[%s1 + $0x180] sm:$0xff] %vm2678, %v2534
    %2728 = vst.msk [vmem:[%s1 + $0x188] sm:$0xff] %vm2678, %v2670
    %2729 = vst.msk [vmem:[%s1 + $0x190] sm:$0xff] %vm2678, %v2535
    %2730 = vst.msk [vmem:[%s1 + $0x198] sm:$0xff] %vm2678, %v2671
    %2731 = vst.msk [vmem:[%s1 + $0x1a0] sm:$0xff] %vm2678, %v2536
    %2732 = vst.msk [vmem:[%s1 + $0x1a8] sm:$0xff] %vm2678, %v2672
    %2733 = vst.msk [vmem:[%s1 + $0x1b0] sm:$0xff] %vm2678, %v2537
    %2734 = vst.msk [vmem:[%s1 + $0x1b8] sm:$0xff] %vm2678, %v2673
    %2735 = vst.msk [vmem:[%s1 + $0x1c0] sm:$0xff] %vm2678, %v2538
    %2736 = vst.msk [vmem:[%s1 + $0x1c8] sm:$0xff] %vm2678, %v2674
    %2737 = vst.msk [vmem:[%s1 + $0x1d0] sm:$0xff] %vm2678, %v2539
    %2738 = vst.msk [vmem:[%s1 + $0x1d8] sm:$0xff] %vm2678, %v2675
    %2739 = vst.msk [vmem:[%s1 + $0x1e0] sm:$0xff] %vm2678, %v2540
    %2740 = vst.msk [vmem:[%s1 + $0x1e8] sm:$0xff] %vm2678, %v2676
    %2741 = vst.msk [vmem:[%s1 + $0x1f0] sm:$0xff] %vm2678, %v2541
    %2742 = vst.msk [vmem:[%s1 + $0x1f8] sm:$0xff] %vm2678, %v2677
    // Predicated region
    $region10: #{tpu_custom_call.1} parent=1 // pred_check
      _
    $region11: #{tpu_custom_call.1} parent=1 // pred_check_branch
      %2744 = sbr.rel (0) target = $region13
    $region12: #{tpu_custom_call.1} parent=1 // pred_region
      _
    $region13: #{tpu_custom_call.1} parent=1 // pred_fallthru
      _
    // Predicated region
    $region14: #{tpu_custom_call.1} parent=1 // pred_check
      _
    $region15: #{tpu_custom_call.1} parent=1 // pred_check_branch
      %2746 = sbr.rel (0) target = $region17
    $region16: #{tpu_custom_call.1} parent=1 // pred_region
      _
    $region17: #{tpu_custom_call.1} parent=1 // pred_fallthru
      _
    %2747 = vsyncpa [#allocation3], 1

</llo_original>
